<compile_context>
chip_gen: v7x
topology: tpu7x:2x2x1
jax: 0.10.0
libtpu: 0.0.40
codegen_flags: <defaults>
</compile_context>

<pallas_src>
import jax
import jax.numpy as jnp
from jax.experimental import pallas as pl
from jax.experimental.pallas import tpu as pltpu


def _vmem_budget_bytes():
    """~75% of physical VMEM (96 MiB v5e/v6e, 48 MiB v7x); safe fallback."""
    try:
        return int(pltpu.get_tpu_info().vmem_capacity_bytes) * 3 // 4
    except Exception:
        return 48 * 1024 * 1024  # conservative: fits every TPU generation


def _pick_tiles(M, H, V, budget):
    """Largest (tm, tv) whose double-buffered VMEM footprint fits `budget`.

    tm (rows per tile) is prioritised: W_lm is re-DMA'd once per row tile,
    so bigger tm cuts the dominant HBM read term; tv >= 512 when possible
    amortises the ~0.35us per-grid-step overhead and keeps stores lane-dense.
    """
    BF16, F32 = 2, 4

    def est(tm, tv):
        resident = H * H * BF16 * 2            # W1 (default double-buffered)
        resident += 2 * 8 * H * F32 * 2        # b1 + w_v rows (sublane-padded)
        stream = tm * H * BF16 * 2             # x in
        stream += tm * 128 * BF16 * 2          # mask (tm,1), lane-padded
        stream += tm * H * BF16 * 2            # hidden_states out (bf16)
        stream += tm * tv * BF16 * 2           # logits out (bf16)
        stream += tm * 128 * F32 * 2           # values (tm,1), lane-padded
        stream += H * tv * BF16 * 2            # W_lm tile
        stream += 8 * tv * F32 * 2             # b_lm tile (sublane-padded)
        return resident + stream

    tm_cands = [c for c in (512, 384, 256, 128, 64, 32, 16, 8) if c <= M] or [M]
    tv_cands = [c for c in (2048, 1536, 1024, 512, 256, 128) if c <= V] or [V]
    for tm in tm_cands:
        for tv in tv_cands:
            if est(tm, tv) <= budget:
                return tm, tv
    return tm_cands[-1], tv_cands[-1]


def _awr_kernel(mask_ref, x_ref, w1_ref, b1_ref, wlm_ref, blm_ref,
                wv_ref, bv_ref,
                hid_ref, logits_ref, values_ref):
    j = pl.program_id(1)  # vocab-tile index (inner, "arbitrary")

    # ---- body + value head: once per row tile (vocab tile 0 only) ----------
    @pl.when(j == 0)
    def _():
        # apply attention mask (0/1) in-kernel; VPU filler under the MXU work
        x = x_ref[...] * mask_ref[...]
        # synthetic transformer body: h = tanh(x @ W1 + b1); bf16 MXU, f32 acc
        h = jnp.tanh(
            jnp.dot(x, w1_ref[...], preferred_element_type=jnp.float32)
            + b1_ref[...]
        )
        # bf16 hidden_states output doubles as the LM-head LHS (resident
        # across the vocab axis) — no separate scratch buffer needed.
        hid_ref[...] = h.astype(hid_ref.dtype)

        # AWR value head on VPU/XLU (no N=1 MXU matmul): v = h @ w_v + b_v
        v = jnp.sum(h * wv_ref[...], axis=-1, keepdims=True) + bv_ref[0, 0]
        values_ref[...] = v.astype(values_ref.dtype)

    # ---- LM head vocab tile (every grid step) -------------------------------
    logits_ref[...] = (
        jnp.dot(hid_ref[...], wlm_ref[...], preferred_element_type=jnp.float32)
        + blm_ref[...]
    ).astype(logits_ref.dtype)


def awr_forward(input_ids, params, attention_mask=None):
    """Pallas implementation of AWRModel.forward.

    input_ids:      [B, S] int32
    attention_mask: [B, S] (optional)
    Returns dict with 'logits' [B,S,V] (bf16), 'values' [B,S,1] (f32),
    'hidden_states' [B,S,H] (bf16).
    """
    B, S = input_ids.shape
    H = params["w1"].shape[0]
    V = params["w_lm"].shape[1]
    M = B * S

    budget = _vmem_budget_bytes()
    tm, tv = _pick_tiles(M, H, V, budget)

    # Embedding lookup stays in XLA (gather fuses with the bf16 cast).
    emb = jnp.take(params["embed"], input_ids, axis=0)            # [B, S, H]
    x = emb.reshape(M, H).astype(jnp.bfloat16)

    if attention_mask is None:
        mask = jnp.ones((M, 1), jnp.bfloat16)
    else:
        mask = attention_mask.reshape(M, 1).astype(jnp.bfloat16)

    w1 = params["w1"].astype(jnp.bfloat16)                        # [H, H]
    b1 = params["b1"].reshape(1, H).astype(jnp.float32)
    w_lm = params["w_lm"].astype(jnp.bfloat16)                    # [H, V]
    b_lm = params["b_lm"].reshape(1, V).astype(jnp.float32)
    w_v = params["w_v"].reshape(1, H).astype(jnp.float32)         # row vector
    b_v = params["b_v"].reshape(1, 1).astype(jnp.float32)

    grid = (pl.cdiv(M, tm), pl.cdiv(V, tv))

    hid, logits, values = pl.pallas_call(
        _awr_kernel,
        out_shape=(
            jax.ShapeDtypeStruct((M, H), jnp.bfloat16),   # hidden_states
            jax.ShapeDtypeStruct((M, V), jnp.bfloat16),   # logits
            jax.ShapeDtypeStruct((M, 1), jnp.float32),    # values
        ),
        grid_spec=pltpu.PrefetchScalarGridSpec(
            num_scalar_prefetch=0,
            grid=grid,
            in_specs=[
                pl.BlockSpec((tm, 1), lambda i, j: (i, 0)),        # mask
                pl.BlockSpec((tm, H), lambda i, j: (i, 0)),        # x: streams over M
                pl.BlockSpec((H, H), lambda i, j: (0, 0)),         # W1: VMEM-resident
                pl.BlockSpec((1, H), lambda i, j: (0, 0)),         # b1
                pl.BlockSpec((H, tv), lambda i, j: (0, j)),        # W_lm tile: streams over V
                pl.BlockSpec((1, tv), lambda i, j: (0, j)),        # b_lm tile
                pl.BlockSpec((1, H), lambda i, j: (0, 0)),         # w_v row: VMEM-resident
                pl.BlockSpec(memory_space=pltpu.MemorySpace.SMEM), # b_v scalar
            ],
            out_specs=(
                pl.BlockSpec((tm, H), lambda i, j: (i, 0)),        # hidden_states (resident over V)
                pl.BlockSpec((tm, tv), lambda i, j: (i, j)),       # logits
                pl.BlockSpec((tm, 1), lambda i, j: (i, 0)),        # values
            ),
        ),
        compiler_params=pltpu.CompilerParams(
            # Row axis "parallel" -> sharded across v7x's two TensorCores;
            # vocab axis "arbitrary" (hid/values are resident across it).
            dimension_semantics=("parallel", "arbitrary"),
            vmem_limit_bytes=budget,
        ),
    )(mask, x, w1, b1, w_lm, b_lm, w_v, b_v)

    return {
        "logits": logits.reshape(B, S, V),
        "values": values.reshape(B, S, 1),
        "hidden_states": hid.reshape(B, S, H),
    }


def init_params(key, vocab_size, hidden_size, scale=0.1):
    ks = jax.random.split(key, 6)
    return {
        "embed": scale * jax.random.normal(ks[0], (vocab_size, hidden_size), jnp.float32),
        "w1":    scale * jax.random.normal(ks[1], (hidden_size, hidden_size), jnp.float32),
        "b1":    jnp.zeros((1, hidden_size), jnp.float32),
        "w_lm":  scale * jax.random.normal(ks[2], (hidden_size, vocab_size), jnp.float32),
        "b_lm":  jnp.zeros((1, vocab_size), jnp.float32),
        # AWR value head: nn.Linear(hidden_size, 1)
        "w_v":   scale * jax.random.normal(ks[3], (hidden_size, 1), jnp.float32),
        "b_v":   jnp.zeros((1, 1), jnp.float32),
    }


def _reference_forward(input_ids, params, attention_mask):
    """Pure-JAX f32 reference of the same synthetic module."""
    emb = jnp.take(params["embed"], input_ids, axis=0)
    x = emb * attention_mask.astype(emb.dtype)[..., None]
    h = jnp.tanh(x @ params["w1"] + params["b1"][0])
    logits = h @ params["w_lm"] + params["b_lm"][0]
    values = h @ params["w_v"] + params["b_v"][0]
    return {"logits": logits, "values": values, "hidden_states": h}


if __name__ == "__main__":
    # Small but TPU-aligned shapes: M = B*S = 256, H = 128, V = 512.
    B, S, H, V = 2, 128, 128, 512
    key = jax.random.PRNGKey(0)
    k_params, k_ids = jax.random.split(key)

    params = init_params(k_params, vocab_size=V, hidden_size=H)
    input_ids = jax.random.randint(k_ids, (B, S), 0, V, dtype=jnp.int32)
    attention_mask = jnp.ones((B, S), jnp.int32)

    out = jax.block_until_ready(awr_forward(input_ids, params, attention_mask))

    assert out["logits"].shape == (B, S, V)
    assert out["values"].shape == (B, S, 1)
    assert out["hidden_states"].shape == (B, S, H)

    # Correctness check vs. pure-JAX f32 reference (loose tol: bf16 MXU inputs
    # and bf16 logits/hidden_states outputs).
    ref = jax.block_until_ready(_reference_forward(input_ids, params, attention_mask))
    hid_f32 = out["hidden_states"].astype(jnp.float32)
    log_f32 = out["logits"].astype(jnp.float32)
    val_f32 = out["values"].astype(jnp.float32)
    assert jnp.allclose(hid_f32, ref["hidden_states"], atol=2e-2, rtol=1e-1)
    assert jnp.allclose(log_f32, ref["logits"], atol=2e-2, rtol=1e-1)
    assert jnp.allclose(val_f32, ref["values"], atol=2e-2, rtol=1e-1)

    print("KERNEL_OK")
</pallas_src>

<mosaic_0001>
module attributes {stable_mosaic.version = 11 : i64} {
  func.func @_awr_kernel(%arg0: i32, %arg1: i32, %arg2: memref<256x1xbf16, #tpu.memory_space<vmem>>, %arg3: memref<256x128xbf16, #tpu.memory_space<vmem>>, %arg4: memref<128x128xbf16, #tpu.memory_space<vmem>>, %arg5: memref<1x128xf32, #tpu.memory_space<vmem>>, %arg6: memref<128x512xbf16, #tpu.memory_space<vmem>>, %arg7: memref<1x512xf32, #tpu.memory_space<vmem>>, %arg8: memref<1x128xf32, #tpu.memory_space<vmem>>, %arg9: memref<1x1xf32, #tpu.memory_space<smem>>, %arg10: memref<256x128xbf16, #tpu.memory_space<vmem>>, %arg11: memref<256x512xbf16, #tpu.memory_space<vmem>>, %arg12: memref<256x1xf32, #tpu.memory_space<vmem>>) attributes {dimension_semantics = [#tpu.dimension_semantics<parallel>, #tpu.dimension_semantics<arbitrary>], iteration_bounds = array<i64: 1, 1>, scalar_prefetch = 0 : i64, scratch_operands = 0 : i64, tpu.core_type = #tpu.core_type<tc>, window_params = [{transform_indices = @transform_0, window_bounds = array<i64: 256, 1>}, {transform_indices = @transform_1, window_bounds = array<i64: 256, 128>}, {pipeline_mode = #tpu.pipeline_mode<synchronous>, transform_indices = @transform_2, window_bounds = array<i64: 128, 128>}, {pipeline_mode = #tpu.pipeline_mode<synchronous>, transform_indices = @transform_3, window_bounds = array<i64: 1, 128>}, {transform_indices = @transform_4, window_bounds = array<i64: 128, 512>}, {transform_indices = @transform_5, window_bounds = array<i64: 1, 512>}, {pipeline_mode = #tpu.pipeline_mode<synchronous>, transform_indices = @transform_6, window_bounds = array<i64: 1, 128>}, {transform_indices = @transform_7, window_bounds = array<i64: 1, 1>}, {transform_indices = @transform_8, window_bounds = array<i64: 256, 128>}, {transform_indices = @transform_9, window_bounds = array<i64: 256, 512>}, {transform_indices = @transform_10, window_bounds = array<i64: 256, 1>}]} {
    %c0_i32 = arith.constant 0 : i32
    %0 = arith.cmpi eq, %arg1, %c0_i32 : i32
    %1 = arith.extui %0 : i1 to i32
    %c0_i32_0 = arith.constant 0 : i32
    %2 = arith.cmpi ne, %1, %c0_i32_0 : i32
    scf.if %2 {
      %c0_8 = arith.constant 0 : index
      %c0_9 = arith.constant 0 : index
      %11 = vector.load %arg3[%c0_8, %c0_9] : memref<256x128xbf16, #tpu.memory_space<vmem>>, vector<256x128xbf16>
      %c0_10 = arith.constant 0 : index
      %c0_11 = arith.constant 0 : index
      %12 = vector.load %arg2[%c0_10, %c0_11] : memref<256x1xbf16, #tpu.memory_space<vmem>>, vector<256x1xbf16>
      %13 = vector.broadcast %12 : vector<256x1xbf16> to vector<256x128xbf16>
      %14 = arith.mulf %11, %13 : vector<256x128xbf16>
      %c0_12 = arith.constant 0 : index
      %c0_13 = arith.constant 0 : index
      %15 = vector.load %arg4[%c0_12, %c0_13] : memref<128x128xbf16, #tpu.memory_space<vmem>>, vector<128x128xbf16>
      %cst_14 = arith.constant dense<0.000000e+00> : vector<256x128xf32>
      %16 = tpu.matmul %14, %15, %cst_14 {dimension_numbers = #tpu.dot_dimension_numbers<[1], [0], [0], [1], [0, 0, 1, 1], [], []>} : vector<256x128xbf16>, vector<128x128xbf16>, vector<256x128xf32> -> vector<256x128xf32>
      %c0_15 = arith.constant 0 : index
      %c0_16 = arith.constant 0 : index
      %17 = vector.load %arg5[%c0_15, %c0_16] : memref<1x128xf32, #tpu.memory_space<vmem>>, vector<1x128xf32>
      %18 = vector.broadcast %17 : vector<1x128xf32> to vector<256x128xf32>
      %19 = arith.addf %16, %18 : vector<256x128xf32>
      %20 = math.tanh %19 : vector<256x128xf32>
      %21 = arith.truncf %20 : vector<256x128xf32> to vector<256x128xbf16>
      %c0_17 = arith.constant 0 : index
      %c0_18 = arith.constant 0 : index
      %22 = vector.load %arg10[%c0_17, %c0_18] : memref<256x128xbf16, #tpu.memory_space<vmem>>, vector<256x128xbf16>
      tpu.vector_store %arg10[%c0_17, %c0_18], %21 {strides = array<i32>} : memref<256x128xbf16, #tpu.memory_space<vmem>>, vector<256x128xbf16>,
      %c0_19 = arith.constant 0 : index
      %c0_20 = arith.constant 0 : index
      %23 = vector.load %arg8[%c0_19, %c0_20] : memref<1x128xf32, #tpu.memory_space<vmem>>, vector<1x128xf32>
      %24 = vector.broadcast %23 : vector<1x128xf32> to vector<256x128xf32>
      %25 = arith.mulf %20, %24 : vector<256x128xf32>
      %cst_21 = arith.constant dense<0.000000e+00> : vector<256xf32>
      %26 = vector.multi_reduction <add>, %25, %cst_21 [1] : vector<256x128xf32> to vector<256xf32>
      %27 = vector.shape_cast %26 : vector<256xf32> to vector<256x1xf32>
      %c0_22 = arith.constant 0 : index
      %c0_23 = arith.constant 0 : index
      %28 = memref.load %arg9[%c0_22, %c0_23] : memref<1x1xf32, #tpu.memory_space<smem>>
      %29 = vector.broadcast %28 : f32 to vector<256x1xf32>
      %30 = arith.addf %27, %29 : vector<256x1xf32>
      %c0_24 = arith.constant 0 : index
      %c0_25 = arith.constant 0 : index
      %31 = vector.load %arg12[%c0_24, %c0_25] : memref<256x1xf32, #tpu.memory_space<vmem>>, vector<256x1xf32>
      tpu.vector_store %arg12[%c0_24, %c0_25], %30 {strides = array<i32>} : memref<256x1xf32, #tpu.memory_space<vmem>>, vector<256x1xf32>,
    } else {
    }
    %c0 = arith.constant 0 : index
    %c0_1 = arith.constant 0 : index
    %3 = vector.load %arg10[%c0, %c0_1] : memref<256x128xbf16, #tpu.memory_space<vmem>>, vector<256x128xbf16>
    %c0_2 = arith.constant 0 : index
    %c0_3 = arith.constant 0 : index
    %4 = vector.load %arg6[%c0_2, %c0_3] : memref<128x512xbf16, #tpu.memory_space<vmem>>, vector<128x512xbf16>
    %cst = arith.constant dense<0.000000e+00> : vector<256x512xf32>
    %5 = tpu.matmul %3, %4, %cst {dimension_numbers = #tpu.dot_dimension_numbers<[1], [0], [0], [1], [0, 0, 1, 1], [], []>} : vector<256x128xbf16>, vector<128x512xbf16>, vector<256x512xf32> -> vector<256x512xf32>
    %c0_4 = arith.constant 0 : index
    %c0_5 = arith.constant 0 : index
    %6 = vector.load %arg7[%c0_4, %c0_5] : memref<1x512xf32, #tpu.memory_space<vmem>>, vector<1x512xf32>
    %7 = vector.broadcast %6 : vector<1x512xf32> to vector<256x512xf32>
    %8 = arith.addf %5, %7 : vector<256x512xf32>
    %9 = arith.truncf %8 : vector<256x512xf32> to vector<256x512xbf16>
    %c0_6 = arith.constant 0 : index
    %c0_7 = arith.constant 0 : index
    %10 = vector.load %arg11[%c0_6, %c0_7] : memref<256x512xbf16, #tpu.memory_space<vmem>>, vector<256x512xbf16>
    tpu.vector_store %arg11[%c0_6, %c0_7], %9 {strides = array<i32>} : memref<256x512xbf16, #tpu.memory_space<vmem>>, vector<256x512xbf16>,
    return
  }
  func.func @transform_0(%arg0: i32, %arg1: i32) -> (i32, i32) {
    %c0_i32 = arith.constant 0 : i32
    %c0_i32_0 = arith.constant 0 : i32
    return %arg0, %c0_i32 : i32, i32
  }
  func.func @transform_1(%arg0: i32, %arg1: i32) -> (i32, i32) {
    %c0_i32 = arith.constant 0 : i32
    %c0_i32_0 = arith.constant 0 : i32
    return %arg0, %c0_i32 : i32, i32
  }
  func.func @transform_2(%arg0: i32, %arg1: i32) -> (i32, i32) {
    %c0_i32 = arith.constant 0 : i32
    %c0_i32_0 = arith.constant 0 : i32
    %c0_i32_1 = arith.constant 0 : i32
    return %c0_i32, %c0_i32_0 : i32, i32
  }
  func.func @transform_3(%arg0: i32, %arg1: i32) -> (i32, i32) {
    %c0_i32 = arith.constant 0 : i32
    %c0_i32_0 = arith.constant 0 : i32
    %c0_i32_1 = arith.constant 0 : i32
    return %c0_i32, %c0_i32_0 : i32, i32
  }
  func.func @transform_4(%arg0: i32, %arg1: i32) -> (i32, i32) {
    %c0_i32 = arith.constant 0 : i32
    %c0_i32_0 = arith.constant 0 : i32
    return %c0_i32, %arg1 : i32, i32
  }
  func.func @transform_5(%arg0: i32, %arg1: i32) -> (i32, i32) {
    %c0_i32 = arith.constant 0 : i32
    %c0_i32_0 = arith.constant 0 : i32
    return %c0_i32, %arg1 : i32, i32
  }
  func.func @transform_6(%arg0: i32, %arg1: i32) -> (i32, i32) {
    %c0_i32 = arith.constant 0 : i32
    %c0_i32_0 = arith.constant 0 : i32
    %c0_i32_1 = arith.constant 0 : i32
    return %c0_i32, %c0_i32_0 : i32, i32
  }
  func.func @transform_7(%arg0: i32, %arg1: i32) -> (i32, i32) {
    %c0_i32 = arith.constant 0 : i32
    %c0_i32_0 = arith.constant 0 : i32
    %c0_i32_1 = arith.constant 0 : i32
    return %c0_i32, %c0_i32_0 : i32, i32
  }
  func.func @transform_8(%arg0: i32, %arg1: i32) -> (i32, i32) {
    %c0_i32 = arith.constant 0 : i32
    %c0_i32_0 = arith.constant 0 : i32
    return %arg0, %c0_i32 : i32, i32
  }
  func.func @transform_9(%arg0: i32, %arg1: i32) -> (i32, i32) {
    %c0_i32 = arith.constant 0 : i32
    return %arg0, %arg1 : i32, i32
  }
  func.func @transform_10(%arg0: i32, %arg1: i32) -> (i32, i32) {
    %c0_i32 = arith.constant 0 : i32
    %c0_i32_0 = arith.constant 0 : i32
    return %arg0, %c0_i32 : i32, i32
  }
}

</mosaic_0001>

<llo_original>
// kernel: tpu_custom_call.1
$region0: #{tpu_custom_call.1}
  #allocation0 [shape = 'u32[]', space=smem, size = 0x4, offset = 0x4, fixed_abs, tag = 'smem constant byte address 0x4 - core index']
  #allocation1 [shape = 'u32[144,128]{1,0:T(1,128)}', space=vmem, size = 0x12000, scoped, tag = 'internal scratch']
  #allocation2 [shape = 'f32[1,1]{1,0:T(1,128)S(6)}', space=smem, size = 0x200, scoped, tag = 'scoped memory for tpu_custom_call.1']
  %s0 = inlined_call_operand.vmem [shape: bf16[256,1], index: 0, kind: input, shape index: {}]
  %s1 = inlined_call_operand.vmem [shape: bf16[256,128], index: 1, kind: input, shape index: {}]
  %s2 = inlined_call_operand.hbm [shape: bf16[128,128], index: 2, kind: input, shape index: {}]
  %s3 = inlined_call_operand.vmem [shape: f32[1,128], index: 3, kind: input, shape index: {}]
  %s4 = inlined_call_operand.hbm [shape: bf16[128,512], index: 4, kind: input, shape index: {}]
  %s5 = inlined_call_operand.vmem [shape: f32[1,512], index: 5, kind: input, shape index: {}]
  %s6 = inlined_call_operand.vmem [shape: f32[1,128], index: 6, kind: input, shape index: {}]
  %s7 = inlined_call_operand.<no memory space> [shape: f32[1,1], index: 7, kind: input, shape index: {}]
  %s8 = inlined_call_operand.hbm [shape: bf16[256,128], index: 8, kind: output, shape index: {0}]
  %s9 = inlined_call_operand.hbm [shape: bf16[256,512], index: 9, kind: output, shape index: {1}]
  %s10 = inlined_call_operand.vmem [shape: f32[256,1], index: 10, kind: output, shape index: {2}]
  %11 = xla_tuple %s8, %s9, %s10
  %s12 = sld [smem:[#allocation0]]
  $region70: #{tpu_custom_call.1} parent=0
    _
  %s14 = ssub.s32 1, %s12
  %s15 = scalar_select 0, %s14, %s12
  %16 = sst [smem:[#allocation2]] %s7
  $region1: #{tpu_custom_call.1} parent=0
    #allocation3 [shape = 'u8[32768]{0}', space=vmem, size = 0x8000, scoped, tag = 'input window, operand 2, single buffered']
    #allocation4 [shape = 's32[1]{0}', space=sflag, size = 0x4, scoped, tag = 'scoped memory for tpu_custom_call.1']
    #allocation5 [shape = 's32[1]{0}', space=sflag, size = 0x4, scoped, tag = 'scoped memory for tpu_custom_call.1']
    #allocation6 [shape = 'u8[131072]{0}', space=vmem, size = 0x20000, scoped, tag = 'input window, operand 4, single buffered']
    #allocation7 [shape = 's32[1]{0}', space=sflag, size = 0x4, scoped, tag = 'scoped memory for tpu_custom_call.1']
    #allocation8 [shape = 'u8[65536]{0}', space=vmem, size = 0x10000, scoped, tag = 'output window, operand 0, single buffered']
    #allocation9 [shape = 'u8[262144]{0}', space=vmem, size = 0x40000, scoped, tag = 'output window, operand 1, single buffered']
    #allocation10 [shape = 's32[1]{0}', space=sflag, size = 0x4, scoped, tag = 'scoped memory for tpu_custom_call.1']
    %17 = vsyncpa [#allocation4], 0
    %18 = vsyncpa [#allocation7], 0
    %19 = vsyncpa [#allocation5], 0
    %20 = vsyncpa [#allocation10], 0
    // Predicated region
    $region2: #{tpu_custom_call.1} parent=1 // pred_check
      _
    $region3: #{tpu_custom_call.1} parent=1 // pred_check_branch
      %22 = sbr.rel (0) target = $region5
    $region4: #{tpu_custom_call.1} parent=1 // pred_region
      _
    $region5: #{tpu_custom_call.1} parent=1 // pred_fallthru
      _
    // Predicated region
    $region6: #{tpu_custom_call.1} parent=1 // pred_check
      _
    $region7: #{tpu_custom_call.1} parent=1 // pred_check_branch
      %24 = sbr.rel (0) target = $region9
    $region8: #{tpu_custom_call.1} parent=1 // pred_region
      _
    $region9: #{tpu_custom_call.1} parent=1 // pred_fallthru
      _
    // Predicated region
    $region10: #{tpu_custom_call.1} parent=1 // pred_check
      _
    $region11: #{tpu_custom_call.1} parent=1 // pred_check_branch
      %26 = sbr.rel (0) target = $region13
    $region12: #{tpu_custom_call.1} parent=1 // pred_region
      %s28 = ssub.s32 1024, 1024
      %29 = vsyncadd [#allocation4], %s28
      %s30 = sshll.u32 [#allocation3], 4
      %s31 = int_to_ptr.vmem [resolvable:$true] %s30
      %36 = dma.hbm_to_vmem [thread:$0]  %s2, 1024, %s31, [#allocation4], 64, 64, 4
    $region13: #{tpu_custom_call.1} parent=1 // pred_fallthru
      _
    // Predicated region
    $region14: #{tpu_custom_call.1} parent=1 // pred_check
      _
    $region15: #{tpu_custom_call.1} parent=1 // pred_check_branch
      %38 = sbr.rel (0) target = $region17
    $region16: #{tpu_custom_call.1} parent=1 // pred_region
      _
    $region17: #{tpu_custom_call.1} parent=1 // pred_fallthru
      _
    // Predicated region
    $region18: #{tpu_custom_call.1} parent=1 // pred_check
      _
    $region19: #{tpu_custom_call.1} parent=1 // pred_check_branch
      %40 = sbr.rel (0) target = $region21
    $region20: #{tpu_custom_call.1} parent=1 // pred_region
      %s42 = ssub.s32 4096, 4096
      %43 = vsyncadd [#allocation7], %s42
      %s44 = sshll.u32 [#allocation6], 4
      %s45 = int_to_ptr.vmem [resolvable:$true] %s44
      %50 = dma.hbm_to_vmem [thread:$0]  %s4, 4096, %s45, [#allocation7], 256, 256, 16
    $region21: #{tpu_custom_call.1} parent=1 // pred_fallthru
      _
    // Predicated region
    $region22: #{tpu_custom_call.1} parent=1 // pred_check
      _
    $region23: #{tpu_custom_call.1} parent=1 // pred_check_branch
      %52 = sbr.rel (0) target = $region25
    $region24: #{tpu_custom_call.1} parent=1 // pred_region
      _
    $region25: #{tpu_custom_call.1} parent=1 // pred_fallthru
      _
    // Predicated region
    $region26: #{tpu_custom_call.1} parent=1 // pred_check
      _
    $region27: #{tpu_custom_call.1} parent=1 // pred_check_branch
      %54 = sbr.rel (0) target = $region29
    $region28: #{tpu_custom_call.1} parent=1 // pred_region
      _
    $region29: #{tpu_custom_call.1} parent=1 // pred_fallthru
      _
    // Predicated region
    $region30: #{tpu_custom_call.1} parent=1 // pred_check
      _
    $region31: #{tpu_custom_call.1} parent=1 // pred_check_branch
      %56 = sbr.rel (0) target = $region33
    $region32: #{tpu_custom_call.1} parent=1 // pred_region
      _
    $region33: #{tpu_custom_call.1} parent=1 // pred_fallthru
      _
    // Predicated region
    $region34: #{tpu_custom_call.1} parent=1 // pred_check
      _
    $region35: #{tpu_custom_call.1} parent=1 // pred_check_branch
      %58 = sbr.rel (0) target = $region37
    $region36: #{tpu_custom_call.1} parent=1 // pred_region
      %59 = dma.done [#allocation4], 1024
    $region37: #{tpu_custom_call.1} parent=1 // pred_fallthru
      _
    // Predicated region
    $region38: #{tpu_custom_call.1} parent=1 // pred_check
      _
    $region39: #{tpu_custom_call.1} parent=1 // pred_check_branch
      %61 = sbr.rel (0) target = $region41
    $region40: #{tpu_custom_call.1} parent=1 // pred_region
      %62 = dma.done [#allocation7], 4096
    $region41: #{tpu_custom_call.1} parent=1 // pred_fallthru
      _
    %p64 = scmp.eq.s32.totalorder 0, 0
    // Predicated region
    $region42: #{tpu_custom_call.1} parent=1 // pred_check
      %p65 = pneg %p64
    $region43: #{tpu_custom_call.1} parent=1 // pred_check_branch
      %67 = sbr.rel (%p65) target = $region45
    $region44: #{tpu_custom_call.1} parent=1 // pred_region
      %v68 = vld [vmem:[%s1] sm:$0xf]
      %v69 = vld [vmem:[%s1 + $0x4] sm:$0xf]
      %v70 = vld [vmem:[%s1 + $0x8] sm:$0xf]
      %v71 = vld [vmem:[%s1 + $0xc] sm:$0xf]
      %v72 = vld [vmem:[%s1 + $0x10] sm:$0xf]
      %v73 = vld [vmem:[%s1 + $0x14] sm:$0xf]
      %v74 = vld [vmem:[%s1 + $0x18] sm:$0xf]
      %v75 = vld [vmem:[%s1 + $0x1c] sm:$0xf]
      %v76 = vld [vmem:[%s1 + $0x20] sm:$0xf]
      %v77 = vld [vmem:[%s1 + $0x24] sm:$0xf]
      %v78 = vld [vmem:[%s1 + $0x28] sm:$0xf]
      %v79 = vld [vmem:[%s1 + $0x2c] sm:$0xf]
      %v80 = vld [vmem:[%s1 + $0x30] sm:$0xf]
      %v81 = vld [vmem:[%s1 + $0x34] sm:$0xf]
      %v82 = vld [vmem:[%s1 + $0x38] sm:$0xf]
      %v83 = vld [vmem:[%s1 + $0x3c] sm:$0xf]
      %v84 = vld [vmem:[%s1 + $0x40] sm:$0xf]
      %v85 = vld [vmem:[%s1 + $0x44] sm:$0xf]
      %v86 = vld [vmem:[%s1 + $0x48] sm:$0xf]
      %v87 = vld [vmem:[%s1 + $0x4c] sm:$0xf]
      %v88 = vld [vmem:[%s1 + $0x50] sm:$0xf]
      %v89 = vld [vmem:[%s1 + $0x54] sm:$0xf]
      %v90 = vld [vmem:[%s1 + $0x58] sm:$0xf]
      %v91 = vld [vmem:[%s1 + $0x5c] sm:$0xf]
      %v92 = vld [vmem:[%s1 + $0x60] sm:$0xf]
      %v93 = vld [vmem:[%s1 + $0x64] sm:$0xf]
      %v94 = vld [vmem:[%s1 + $0x68] sm:$0xf]
      %v95 = vld [vmem:[%s1 + $0x6c] sm:$0xf]
      %v96 = vld [vmem:[%s1 + $0x70] sm:$0xf]
      %v97 = vld [vmem:[%s1 + $0x74] sm:$0xf]
      %v98 = vld [vmem:[%s1 + $0x78] sm:$0xf]
      %v99 = vld [vmem:[%s1 + $0x7c] sm:$0xf]
      %v100 = vld [vmem:[%s0] sm:$0xf]
      %v101 = vld [vmem:[%s0 + $0x4] sm:$0xf]
      %v102 = vld [vmem:[%s0 + $0x8] sm:$0xf]
      %v103 = vld [vmem:[%s0 + $0xc] sm:$0xf]
      %v104 = vld [vmem:[%s0 + $0x10] sm:$0xf]
      %v105 = vld [vmem:[%s0 + $0x14] sm:$0xf]
      %v106 = vld [vmem:[%s0 + $0x18] sm:$0xf]
      %v107 = vld [vmem:[%s0 + $0x1c] sm:$0xf]
      %v108 = vld [vmem:[%s0 + $0x20] sm:$0xf]
      %v109 = vld [vmem:[%s0 + $0x24] sm:$0xf]
      %v110 = vld [vmem:[%s0 + $0x28] sm:$0xf]
      %v111 = vld [vmem:[%s0 + $0x2c] sm:$0xf]
      %v112 = vld [vmem:[%s0 + $0x30] sm:$0xf]
      %v113 = vld [vmem:[%s0 + $0x34] sm:$0xf]
      %v114 = vld [vmem:[%s0 + $0x38] sm:$0xf]
      %v115 = vld [vmem:[%s0 + $0x3c] sm:$0xf]
      %v116 = vld [vmem:[%s0 + $0x40] sm:$0xf]
      %v117 = vld [vmem:[%s0 + $0x44] sm:$0xf]
      %v118 = vld [vmem:[%s0 + $0x48] sm:$0xf]
      %v119 = vld [vmem:[%s0 + $0x4c] sm:$0xf]
      %v120 = vld [vmem:[%s0 + $0x50] sm:$0xf]
      %v121 = vld [vmem:[%s0 + $0x54] sm:$0xf]
      %v122 = vld [vmem:[%s0 + $0x58] sm:$0xf]
      %v123 = vld [vmem:[%s0 + $0x5c] sm:$0xf]
      %v124 = vld [vmem:[%s0 + $0x60] sm:$0xf]
      %v125 = vld [vmem:[%s0 + $0x64] sm:$0xf]
      %v126 = vld [vmem:[%s0 + $0x68] sm:$0xf]
      %v127 = vld [vmem:[%s0 + $0x6c] sm:$0xf]
      %v128 = vld [vmem:[%s0 + $0x70] sm:$0xf]
      %v129 = vld [vmem:[%s0 + $0x74] sm:$0xf]
      %v130 = vld [vmem:[%s0 + $0x78] sm:$0xf]
      %v131 = vld [vmem:[%s0 + $0x7c] sm:$0xf]
      %133 = vset.pattern.permute.xlu0 0
      %134 = vperm.xlu0 %133, %v100
      %v135 = vpop.permute.xlu0 %134
      %v138 = vunpack.c.l.s4 839922192
      %v139 = vunpack.c.0.s8 %v138
      %v140 = vlaneseq
      %v141 = vshrl.u32 %v140, 7
      %v142 = vsub.s32 %v139, %v141
      %v143 = vrot.slane %v135, %v142
      %145 = vset.pattern.permute.xlu0 0
      %146 = vperm.xlu0 %145, %v101
      %v147 = vpop.permute.xlu0 %146
      %v150 = vunpack.c.l.s4 839922192
      %v151 = vunpack.c.0.s8 %v150
      %v152 = vlaneseq
      %v153 = vshrl.u32 %v152, 7
      %v154 = vsub.s32 %v151, %v153
      %v155 = vrot.slane %v147, %v154
      %157 = vset.pattern.permute.xlu0 0
      %158 = vperm.xlu0 %157, %v102
      %v159 = vpop.permute.xlu0 %158
      %v162 = vunpack.c.l.s4 839922192
      %v163 = vunpack.c.0.s8 %v162
      %v164 = vlaneseq
      %v165 = vshrl.u32 %v164, 7
      %v166 = vsub.s32 %v163, %v165
      %v167 = vrot.slane %v159, %v166
      %169 = vset.pattern.permute.xlu0 0
      %170 = vperm.xlu0 %169, %v103
      %v171 = vpop.permute.xlu0 %170
      %v174 = vunpack.c.l.s4 839922192
      %v175 = vunpack.c.0.s8 %v174
      %v176 = vlaneseq
      %v177 = vshrl.u32 %v176, 7
      %v178 = vsub.s32 %v175, %v177
      %v179 = vrot.slane %v171, %v178
      %181 = vset.pattern.permute.xlu0 0
      %182 = vperm.xlu0 %181, %v104
      %v183 = vpop.permute.xlu0 %182
      %v186 = vunpack.c.l.s4 839922192
      %v187 = vunpack.c.0.s8 %v186
      %v188 = vlaneseq
      %v189 = vshrl.u32 %v188, 7
      %v190 = vsub.s32 %v187, %v189
      %v191 = vrot.slane %v183, %v190
      %193 = vset.pattern.permute.xlu0 0
      %194 = vperm.xlu0 %193, %v105
      %v195 = vpop.permute.xlu0 %194
      %v198 = vunpack.c.l.s4 839922192
      %v199 = vunpack.c.0.s8 %v198
      %v200 = vlaneseq
      %v201 = vshrl.u32 %v200, 7
      %v202 = vsub.s32 %v199, %v201
      %v203 = vrot.slane %v195, %v202
      %205 = vset.pattern.permute.xlu0 0
      %206 = vperm.xlu0 %205, %v106
      %v207 = vpop.permute.xlu0 %206
      %v210 = vunpack.c.l.s4 839922192
      %v211 = vunpack.c.0.s8 %v210
      %v212 = vlaneseq
      %v213 = vshrl.u32 %v212, 7
      %v214 = vsub.s32 %v211, %v213
      %v215 = vrot.slane %v207, %v214
      %217 = vset.pattern.permute.xlu0 0
      %218 = vperm.xlu0 %217, %v107
      %v219 = vpop.permute.xlu0 %218
      %v222 = vunpack.c.l.s4 839922192
      %v223 = vunpack.c.0.s8 %v222
      %v224 = vlaneseq
      %v225 = vshrl.u32 %v224, 7
      %v226 = vsub.s32 %v223, %v225
      %v227 = vrot.slane %v219, %v226
      %229 = vset.pattern.permute.xlu0 0
      %230 = vperm.xlu0 %229, %v108
      %v231 = vpop.permute.xlu0 %230
      %v234 = vunpack.c.l.s4 839922192
      %v235 = vunpack.c.0.s8 %v234
      %v236 = vlaneseq
      %v237 = vshrl.u32 %v236, 7
      %v238 = vsub.s32 %v235, %v237
      %v239 = vrot.slane %v231, %v238
      %241 = vset.pattern.permute.xlu0 0
      %242 = vperm.xlu0 %241, %v109
      %v243 = vpop.permute.xlu0 %242
      %v246 = vunpack.c.l.s4 839922192
      %v247 = vunpack.c.0.s8 %v246
      %v248 = vlaneseq
      %v249 = vshrl.u32 %v248, 7
      %v250 = vsub.s32 %v247, %v249
      %v251 = vrot.slane %v243, %v250
      %253 = vset.pattern.permute.xlu0 0
      %254 = vperm.xlu0 %253, %v110
      %v255 = vpop.permute.xlu0 %254
      %v258 = vunpack.c.l.s4 839922192
      %v259 = vunpack.c.0.s8 %v258
      %v260 = vlaneseq
      %v261 = vshrl.u32 %v260, 7
      %v262 = vsub.s32 %v259, %v261
      %v263 = vrot.slane %v255, %v262
      %265 = vset.pattern.permute.xlu0 0
      %266 = vperm.xlu0 %265, %v111
      %v267 = vpop.permute.xlu0 %266
      %v270 = vunpack.c.l.s4 839922192
      %v271 = vunpack.c.0.s8 %v270
      %v272 = vlaneseq
      %v273 = vshrl.u32 %v272, 7
      %v274 = vsub.s32 %v271, %v273
      %v275 = vrot.slane %v267, %v274
      %277 = vset.pattern.permute.xlu0 0
      %278 = vperm.xlu0 %277, %v112
      %v279 = vpop.permute.xlu0 %278
      %v282 = vunpack.c.l.s4 839922192
      %v283 = vunpack.c.0.s8 %v282
      %v284 = vlaneseq
      %v285 = vshrl.u32 %v284, 7
      %v286 = vsub.s32 %v283, %v285
      %v287 = vrot.slane %v279, %v286
      %289 = vset.pattern.permute.xlu0 0
      %290 = vperm.xlu0 %289, %v113
      %v291 = vpop.permute.xlu0 %290
      %v294 = vunpack.c.l.s4 839922192
      %v295 = vunpack.c.0.s8 %v294
      %v296 = vlaneseq
      %v297 = vshrl.u32 %v296, 7
      %v298 = vsub.s32 %v295, %v297
      %v299 = vrot.slane %v291, %v298
      %301 = vset.pattern.permute.xlu0 0
      %302 = vperm.xlu0 %301, %v114
      %v303 = vpop.permute.xlu0 %302
      %v306 = vunpack.c.l.s4 839922192
      %v307 = vunpack.c.0.s8 %v306
      %v308 = vlaneseq
      %v309 = vshrl.u32 %v308, 7
      %v310 = vsub.s32 %v307, %v309
      %v311 = vrot.slane %v303, %v310
      %313 = vset.pattern.permute.xlu0 0
      %314 = vperm.xlu0 %313, %v115
      %v315 = vpop.permute.xlu0 %314
      %v318 = vunpack.c.l.s4 839922192
      %v319 = vunpack.c.0.s8 %v318
      %v320 = vlaneseq
      %v321 = vshrl.u32 %v320, 7
      %v322 = vsub.s32 %v319, %v321
      %v323 = vrot.slane %v315, %v322
      %325 = vset.pattern.permute.xlu0 0
      %326 = vperm.xlu0 %325, %v116
      %v327 = vpop.permute.xlu0 %326
      %v330 = vunpack.c.l.s4 839922192
      %v331 = vunpack.c.0.s8 %v330
      %v332 = vlaneseq
      %v333 = vshrl.u32 %v332, 7
      %v334 = vsub.s32 %v331, %v333
      %v335 = vrot.slane %v327, %v334
      %337 = vset.pattern.permute.xlu0 0
      %338 = vperm.xlu0 %337, %v117
      %v339 = vpop.permute.xlu0 %338
      %v342 = vunpack.c.l.s4 839922192
      %v343 = vunpack.c.0.s8 %v342
      %v344 = vlaneseq
      %v345 = vshrl.u32 %v344, 7
      %v346 = vsub.s32 %v343, %v345
      %v347 = vrot.slane %v339, %v346
      %349 = vset.pattern.permute.xlu0 0
      %350 = vperm.xlu0 %349, %v118
      %v351 = vpop.permute.xlu0 %350
      %v354 = vunpack.c.l.s4 839922192
      %v355 = vunpack.c.0.s8 %v354
      %v356 = vlaneseq
      %v357 = vshrl.u32 %v356, 7
      %v358 = vsub.s32 %v355, %v357
      %v359 = vrot.slane %v351, %v358
      %361 = vset.pattern.permute.xlu0 0
      %362 = vperm.xlu0 %361, %v119
      %v363 = vpop.permute.xlu0 %362
      %v366 = vunpack.c.l.s4 839922192
      %v367 = vunpack.c.0.s8 %v366
      %v368 = vlaneseq
      %v369 = vshrl.u32 %v368, 7
      %v370 = vsub.s32 %v367, %v369
      %v371 = vrot.slane %v363, %v370
      %373 = vset.pattern.permute.xlu0 0
      %374 = vperm.xlu0 %373, %v120
      %v375 = vpop.permute.xlu0 %374
      %v378 = vunpack.c.l.s4 839922192
      %v379 = vunpack.c.0.s8 %v378
      %v380 = vlaneseq
      %v381 = vshrl.u32 %v380, 7
      %v382 = vsub.s32 %v379, %v381
      %v383 = vrot.slane %v375, %v382
      %385 = vset.pattern.permute.xlu0 0
      %386 = vperm.xlu0 %385, %v121
      %v387 = vpop.permute.xlu0 %386
      %v390 = vunpack.c.l.s4 839922192
      %v391 = vunpack.c.0.s8 %v390
      %v392 = vlaneseq
      %v393 = vshrl.u32 %v392, 7
      %v394 = vsub.s32 %v391, %v393
      %v395 = vrot.slane %v387, %v394
      %397 = vset.pattern.permute.xlu0 0
      %398 = vperm.xlu0 %397, %v122
      %v399 = vpop.permute.xlu0 %398
      %v402 = vunpack.c.l.s4 839922192
      %v403 = vunpack.c.0.s8 %v402
      %v404 = vlaneseq
      %v405 = vshrl.u32 %v404, 7
      %v406 = vsub.s32 %v403, %v405
      %v407 = vrot.slane %v399, %v406
      %409 = vset.pattern.permute.xlu0 0
      %410 = vperm.xlu0 %409, %v123
      %v411 = vpop.permute.xlu0 %410
      %v414 = vunpack.c.l.s4 839922192
      %v415 = vunpack.c.0.s8 %v414
      %v416 = vlaneseq
      %v417 = vshrl.u32 %v416, 7
      %v418 = vsub.s32 %v415, %v417
      %v419 = vrot.slane %v411, %v418
      %421 = vset.pattern.permute.xlu0 0
      %422 = vperm.xlu0 %421, %v124
      %v423 = vpop.permute.xlu0 %422
      %v426 = vunpack.c.l.s4 839922192
      %v427 = vunpack.c.0.s8 %v426
      %v428 = vlaneseq
      %v429 = vshrl.u32 %v428, 7
      %v430 = vsub.s32 %v427, %v429
      %v431 = vrot.slane %v423, %v430
      %433 = vset.pattern.permute.xlu0 0
      %434 = vperm.xlu0 %433, %v125
      %v435 = vpop.permute.xlu0 %434
      %v438 = vunpack.c.l.s4 839922192
      %v439 = vunpack.c.0.s8 %v438
      %v440 = vlaneseq
      %v441 = vshrl.u32 %v440, 7
      %v442 = vsub.s32 %v439, %v441
      %v443 = vrot.slane %v435, %v442
      %445 = vset.pattern.permute.xlu0 0
      %446 = vperm.xlu0 %445, %v126
      %v447 = vpop.permute.xlu0 %446
      %v450 = vunpack.c.l.s4 839922192
      %v451 = vunpack.c.0.s8 %v450
      %v452 = vlaneseq
      %v453 = vshrl.u32 %v452, 7
      %v454 = vsub.s32 %v451, %v453
      %v455 = vrot.slane %v447, %v454
      %457 = vset.pattern.permute.xlu0 0
      %458 = vperm.xlu0 %457, %v127
      %v459 = vpop.permute.xlu0 %458
      %v462 = vunpack.c.l.s4 839922192
      %v463 = vunpack.c.0.s8 %v462
      %v464 = vlaneseq
      %v465 = vshrl.u32 %v464, 7
      %v466 = vsub.s32 %v463, %v465
      %v467 = vrot.slane %v459, %v466
      %469 = vset.pattern.permute.xlu0 0
      %470 = vperm.xlu0 %469, %v128
      %v471 = vpop.permute.xlu0 %470
      %v474 = vunpack.c.l.s4 839922192
      %v475 = vunpack.c.0.s8 %v474
      %v476 = vlaneseq
      %v477 = vshrl.u32 %v476, 7
      %v478 = vsub.s32 %v475, %v477
      %v479 = vrot.slane %v471, %v478
      %481 = vset.pattern.permute.xlu0 0
      %482 = vperm.xlu0 %481, %v129
      %v483 = vpop.permute.xlu0 %482
      %v486 = vunpack.c.l.s4 839922192
      %v487 = vunpack.c.0.s8 %v486
      %v488 = vlaneseq
      %v489 = vshrl.u32 %v488, 7
      %v490 = vsub.s32 %v487, %v489
      %v491 = vrot.slane %v483, %v490
      %493 = vset.pattern.permute.xlu0 0
      %494 = vperm.xlu0 %493, %v130
      %v495 = vpop.permute.xlu0 %494
      %v498 = vunpack.c.l.s4 839922192
      %v499 = vunpack.c.0.s8 %v498
      %v500 = vlaneseq
      %v501 = vshrl.u32 %v500, 7
      %v502 = vsub.s32 %v499, %v501
      %v503 = vrot.slane %v495, %v502
      %505 = vset.pattern.permute.xlu0 0
      %506 = vperm.xlu0 %505, %v131
      %v507 = vpop.permute.xlu0 %506
      %v510 = vunpack.c.l.s4 839922192
      %v511 = vunpack.c.0.s8 %v510
      %v512 = vlaneseq
      %v513 = vshrl.u32 %v512, 7
      %v514 = vsub.s32 %v511, %v513
      %v515 = vrot.slane %v507, %v514
      %v516 = vmul.bf16 %v68, %v143
      %v517 = vmul.bf16 %v69, %v155
      %v518 = vmul.bf16 %v70, %v167
      %v519 = vmul.bf16 %v71, %v179
      %v520 = vmul.bf16 %v72, %v191
      %v521 = vmul.bf16 %v73, %v203
      %v522 = vmul.bf16 %v74, %v215
      %v523 = vmul.bf16 %v75, %v227
      %v524 = vmul.bf16 %v76, %v239
      %v525 = vmul.bf16 %v77, %v251
      %v526 = vmul.bf16 %v78, %v263
      %v527 = vmul.bf16 %v79, %v275
      %v528 = vmul.bf16 %v80, %v287
      %v529 = vmul.bf16 %v81, %v299
      %v530 = vmul.bf16 %v82, %v311
      %v531 = vmul.bf16 %v83, %v323
      %v532 = vmul.bf16 %v84, %v335
      %v533 = vmul.bf16 %v85, %v347
      %v534 = vmul.bf16 %v86, %v359
      %v535 = vmul.bf16 %v87, %v371
      %v536 = vmul.bf16 %v88, %v383
      %v537 = vmul.bf16 %v89, %v395
      %v538 = vmul.bf16 %v90, %v407
      %v539 = vmul.bf16 %v91, %v419
      %v540 = vmul.bf16 %v92, %v431
      %v541 = vmul.bf16 %v93, %v443
      %v542 = vmul.bf16 %v94, %v455
      %v543 = vmul.bf16 %v95, %v467
      %v544 = vmul.bf16 %v96, %v479
      %v545 = vmul.bf16 %v97, %v491
      %v546 = vmul.bf16 %v98, %v503
      %v547 = vmul.bf16 %v99, %v515
      %v548 = vld [vmem:[#allocation3] sm:$0xf]
      %v549 = vld [vmem:[#allocation3 + $0x4] sm:$0xf]
      %v550 = vld [vmem:[#allocation3 + $0x8] sm:$0xf]
      %v551 = vld [vmem:[#allocation3 + $0xc] sm:$0xf]
      %v552 = vld [vmem:[#allocation3 + $0x10] sm:$0xf]
      %v553 = vld [vmem:[#allocation3 + $0x14] sm:$0xf]
      %v554 = vld [vmem:[#allocation3 + $0x18] sm:$0xf]
      %v555 = vld [vmem:[#allocation3 + $0x1c] sm:$0xf]
      %v556 = vld [vmem:[#allocation3 + $0x20] sm:$0xf]
      %v557 = vld [vmem:[#allocation3 + $0x24] sm:$0xf]
      %v558 = vld [vmem:[#allocation3 + $0x28] sm:$0xf]
      %v559 = vld [vmem:[#allocation3 + $0x2c] sm:$0xf]
      %v560 = vld [vmem:[#allocation3 + $0x30] sm:$0xf]
      %v561 = vld [vmem:[#allocation3 + $0x34] sm:$0xf]
      %v562 = vld [vmem:[#allocation3 + $0x38] sm:$0xf]
      %v563 = vld [vmem:[#allocation3 + $0x3c] sm:$0xf]
      %v564 = vld [vmem:[%s3] sm:$0x1]
      %v566 = vlaneseq
      %v567 = vshrl.u32 %v566, 7
      %v568 = vsub.s32 0, %v567
      %v569 = vrot.slane %v564, %v568
      %v603 = vunpack.c.l.b16 %v516
      %v604 = vunpack.c.l.b16 %v517
      %v605 = vunpack.c.l.b16 %v518
      %v606 = vunpack.c.l.b16 %v519
      %v607 = vunpack.c.l.b16 %v520
      %v608 = vunpack.c.l.b16 %v521
      %v609 = vunpack.c.l.b16 %v522
      %v610 = vunpack.c.l.b16 %v523
      %v611 = vunpack.c.l.b16 %v524
      %v612 = vunpack.c.l.b16 %v525
      %v613 = vunpack.c.l.b16 %v526
      %v614 = vunpack.c.l.b16 %v527
      %v615 = vunpack.c.l.b16 %v528
      %v616 = vunpack.c.l.b16 %v529
      %v617 = vunpack.c.l.b16 %v530
      %v618 = vunpack.c.l.b16 %v531
      %v619 = vunpack.c.l.b16 %v532
      %v620 = vunpack.c.l.b16 %v533
      %v621 = vunpack.c.l.b16 %v534
      %v622 = vunpack.c.l.b16 %v535
      %v623 = vunpack.c.l.b16 %v536
      %v624 = vunpack.c.l.b16 %v537
      %v625 = vunpack.c.l.b16 %v538
      %v626 = vunpack.c.l.b16 %v539
      %v627 = vunpack.c.l.b16 %v540
      %v628 = vunpack.c.l.b16 %v541
      %v629 = vunpack.c.l.b16 %v542
      %v630 = vunpack.c.l.b16 %v543
      %v631 = vunpack.c.l.b16 %v544
      %v632 = vunpack.c.l.b16 %v545
      %v633 = vunpack.c.l.b16 %v546
      %v634 = vunpack.c.l.b16 %v547
      %v635 = vpack.c.b16 %v604, %v603
      %v636 = vpack.c.b16 %v606, %v605
      %v637 = vpack.c.b16 %v608, %v607
      %v638 = vpack.c.b16 %v610, %v609
      %v639 = vpack.c.b16 %v612, %v611
      %v640 = vpack.c.b16 %v614, %v613
      %v641 = vpack.c.b16 %v616, %v615
      %v642 = vpack.c.b16 %v618, %v617
      %v643 = vpack.c.b16 %v620, %v619
      %v644 = vpack.c.b16 %v622, %v621
      %v645 = vpack.c.b16 %v624, %v623
      %v646 = vpack.c.b16 %v626, %v625
      %v647 = vpack.c.b16 %v628, %v627
      %v648 = vpack.c.b16 %v630, %v629
      %v649 = vpack.c.b16 %v632, %v631
      %v650 = vpack.c.b16 %v634, %v633
      %v683 = vunpack.c.l.b16 %v548
      %v684 = vunpack.c.l.b16 %v549
      %v685 = vunpack.c.l.b16 %v550
      %v686 = vunpack.c.l.b16 %v551
      %v687 = vunpack.c.l.b16 %v552
      %v688 = vunpack.c.l.b16 %v553
      %v689 = vunpack.c.l.b16 %v554
      %v690 = vunpack.c.l.b16 %v555
      %v691 = vunpack.c.l.b16 %v556
      %v692 = vunpack.c.l.b16 %v557
      %v693 = vunpack.c.l.b16 %v558
      %v694 = vunpack.c.l.b16 %v559
      %v695 = vunpack.c.l.b16 %v560
      %v696 = vunpack.c.l.b16 %v561
      %v697 = vunpack.c.l.b16 %v562
      %v698 = vunpack.c.l.b16 %v563
      %v699 = vpack.c.b16 %v684, %v683
      %v700 = vpack.c.b16 %v686, %v685
      %v701 = vpack.c.b16 %v688, %v687
      %v702 = vpack.c.b16 %v690, %v689
      %v703 = vpack.c.b16 %v692, %v691
      %v704 = vpack.c.b16 %v694, %v693
      %v705 = vpack.c.b16 %v696, %v695
      %v706 = vpack.c.b16 %v698, %v697
      %715 = vmatprep.subr.bf16.mxu0 0
      %716 = vmatpush1.bf16.msra.mxu0 %v699
      %717 = vmatprep.subr.bf16.mxu0 0
      %718 = vmatpush1.bf16.msra.mxu0 %v700
      %719 = vmatprep.subr.bf16.mxu0 0
      %720 = vmatpush1.bf16.msra.mxu0 %v701
      %721 = vmatprep.subr.bf16.mxu0 0
      %722 = vmatpush1.bf16.msra.mxu0 %v702
      %723 = vmatprep.subr.bf16.mxu0 0
      %724 = vmatpush1.bf16.msra.mxu0 %v703
      %725 = vmatprep.subr.bf16.mxu0 0
      %726 = vmatpush1.bf16.msra.mxu0 %v704
      %727 = vmatprep.subr.bf16.mxu0 0
      %728 = vmatpush1.bf16.msra.mxu0 %v705
      %729 = vmatprep.subr.bf16.mxu0 0
      %730 = vmatpush1.bf16.msra.mxu0 %v706
      %731 = vmatprep.subr.bf16.mxu0 0
      %732 = vmatpush1.bf16.msra.mxu0 0
      %733 = vmatprep.subr.bf16.mxu0 0
      %734 = vmatpush1.bf16.msra.mxu0 0
      %735 = vmatprep.subr.bf16.mxu0 0
      %736 = vmatpush1.bf16.msra.mxu0 0
      %737 = vmatprep.subr.bf16.mxu0 0
      %738 = vmatpush1.bf16.msra.mxu0 0
      %739 = vmatprep.subr.bf16.mxu0 0
      %740 = vmatpush1.bf16.msra.mxu0 0
      %741 = vmatprep.subr.bf16.mxu0 0
      %742 = vmatpush1.bf16.msra.mxu0 0
      %743 = vmatprep.subr.bf16.mxu0 0
      %744 = vmatpush1.bf16.msra.mxu0 0
      %745 = vmatprep.subr.bf16.mxu0 0
      %746 = vmatpush1.bf16.msra.mxu0 0
      %747 = vmatprep.mubr.bf16.mxu0 0
      %748 = vmatmul.mubr.bf16.gmra.mrb[0].mxu0 %v635
      %v749 = vpop.f32.mrb[0].mxu0
      %v750 = vadd.f32 %v569, %v749
      %v751 = vpop.f32.mrb[0].mxu0
      %v752 = vpop.f32.mrb[0].mxu0
      %v753 = vadd.f32 %v569, %v752
      %v754 = vpop.f32.mrb[0].mxu0
      %755 = vmatprep.mubr.bf16.mxu0 0
      %756 = vmatmul.mubr.bf16.gmra.mrb[0].mxu0 %v636
      %v757 = vpop.f32.mrb[0].mxu0
      %v758 = vadd.f32 %v569, %v757
      %v759 = vpop.f32.mrb[0].mxu0
      %v760 = vpop.f32.mrb[0].mxu0
      %v761 = vadd.f32 %v569, %v760
      %v762 = vpop.f32.mrb[0].mxu0
      %763 = vmatprep.mubr.bf16.mxu0 0
      %764 = vmatmul.mubr.bf16.gmra.mrb[0].mxu0 %v637
      %v765 = vpop.f32.mrb[0].mxu0
      %v766 = vadd.f32 %v569, %v765
      %v767 = vpop.f32.mrb[0].mxu0
      %v768 = vpop.f32.mrb[0].mxu0
      %v769 = vadd.f32 %v569, %v768
      %v770 = vpop.f32.mrb[0].mxu0
      %771 = vmatprep.mubr.bf16.mxu0 0
      %772 = vmatmul.mubr.bf16.gmra.mrb[0].mxu0 %v638
      %v773 = vpop.f32.mrb[0].mxu0
      %v774 = vadd.f32 %v569, %v773
      %v775 = vpop.f32.mrb[0].mxu0
      %v776 = vpop.f32.mrb[0].mxu0
      %v777 = vadd.f32 %v569, %v776
      %v778 = vpop.f32.mrb[0].mxu0
      %779 = vmatprep.mubr.bf16.mxu0 0
      %780 = vmatmul.mubr.bf16.gmra.mrb[0].mxu0 %v639
      %v781 = vpop.f32.mrb[0].mxu0
      %v782 = vadd.f32 %v569, %v781
      %v783 = vpop.f32.mrb[0].mxu0
      %v784 = vpop.f32.mrb[0].mxu0
      %v785 = vadd.f32 %v569, %v784
      %v786 = vpop.f32.mrb[0].mxu0
      %787 = vmatprep.mubr.bf16.mxu0 0
      %788 = vmatmul.mubr.bf16.gmra.mrb[0].mxu0 %v640
      %v789 = vpop.f32.mrb[0].mxu0
      %v790 = vadd.f32 %v569, %v789
      %v791 = vpop.f32.mrb[0].mxu0
      %v792 = vpop.f32.mrb[0].mxu0
      %v793 = vadd.f32 %v569, %v792
      %v794 = vpop.f32.mrb[0].mxu0
      %795 = vmatprep.mubr.bf16.mxu0 0
      %796 = vmatmul.mubr.bf16.gmra.mrb[0].mxu0 %v641
      %v797 = vpop.f32.mrb[0].mxu0
      %v798 = vadd.f32 %v569, %v797
      %v799 = vpop.f32.mrb[0].mxu0
      %v800 = vpop.f32.mrb[0].mxu0
      %v801 = vadd.f32 %v569, %v800
      %v802 = vpop.f32.mrb[0].mxu0
      %803 = vmatprep.mubr.bf16.mxu0 0
      %804 = vmatmul.mubr.bf16.gmra.mrb[0].mxu0 %v642
      %v805 = vpop.f32.mrb[0].mxu0
      %v806 = vadd.f32 %v569, %v805
      %v807 = vpop.f32.mrb[0].mxu0
      %v808 = vpop.f32.mrb[0].mxu0
      %v809 = vadd.f32 %v569, %v808
      %v810 = vpop.f32.mrb[0].mxu0
      %811 = vmatprep.mubr.bf16.mxu0 0
      %812 = vmatmul.mubr.bf16.gmra.mrb[0].mxu0 %v643
      %v813 = vpop.f32.mrb[0].mxu0
      %v814 = vadd.f32 %v569, %v813
      %v815 = vpop.f32.mrb[0].mxu0
      %v816 = vpop.f32.mrb[0].mxu0
      %v817 = vadd.f32 %v569, %v816
      %v818 = vpop.f32.mrb[0].mxu0
      %819 = vmatprep.mubr.bf16.mxu0 0
      %820 = vmatmul.mubr.bf16.gmra.mrb[0].mxu0 %v644
      %v821 = vpop.f32.mrb[0].mxu0
      %v822 = vadd.f32 %v569, %v821
      %v823 = vpop.f32.mrb[0].mxu0
      %v824 = vpop.f32.mrb[0].mxu0
      %v825 = vadd.f32 %v569, %v824
      %v826 = vpop.f32.mrb[0].mxu0
      %827 = vmatprep.mubr.bf16.mxu0 0
      %828 = vmatmul.mubr.bf16.gmra.mrb[0].mxu0 %v645
      %v829 = vpop.f32.mrb[0].mxu0
      %v830 = vadd.f32 %v569, %v829
      %v831 = vpop.f32.mrb[0].mxu0
      %v832 = vpop.f32.mrb[0].mxu0
      %v833 = vadd.f32 %v569, %v832
      %v834 = vpop.f32.mrb[0].mxu0
      %835 = vmatprep.mubr.bf16.mxu0 0
      %836 = vmatmul.mubr.bf16.gmra.mrb[0].mxu0 %v646
      %v837 = vpop.f32.mrb[0].mxu0
      %v838 = vadd.f32 %v569, %v837
      %v839 = vpop.f32.mrb[0].mxu0
      %v840 = vpop.f32.mrb[0].mxu0
      %v841 = vadd.f32 %v569, %v840
      %v842 = vpop.f32.mrb[0].mxu0
      %843 = vmatprep.mubr.bf16.mxu0 0
      %844 = vmatmul.mubr.bf16.gmra.mrb[0].mxu0 %v647
      %v845 = vpop.f32.mrb[0].mxu0
      %v846 = vadd.f32 %v569, %v845
      %v847 = vpop.f32.mrb[0].mxu0
      %v848 = vpop.f32.mrb[0].mxu0
      %v849 = vadd.f32 %v569, %v848
      %v850 = vpop.f32.mrb[0].mxu0
      %851 = vmatprep.mubr.bf16.mxu0 0
      %852 = vmatmul.mubr.bf16.gmra.mrb[0].mxu0 %v648
      %v853 = vpop.f32.mrb[0].mxu0
      %v854 = vadd.f32 %v569, %v853
      %v855 = vpop.f32.mrb[0].mxu0
      %v856 = vpop.f32.mrb[0].mxu0
      %v857 = vadd.f32 %v569, %v856
      %v858 = vpop.f32.mrb[0].mxu0
      %859 = vmatprep.mubr.bf16.mxu0 0
      %860 = vmatmul.mubr.bf16.gmra.mrb[0].mxu0 %v649
      %v861 = vpop.f32.mrb[0].mxu0
      %v862 = vadd.f32 %v569, %v861
      %v863 = vpop.f32.mrb[0].mxu0
      %v864 = vpop.f32.mrb[0].mxu0
      %v865 = vadd.f32 %v569, %v864
      %v866 = vpop.f32.mrb[0].mxu0
      %867 = vmatprep.mubr.bf16.mxu0 0
      %868 = vmatmul.mubr.bf16.gmra.mrb[0].mxu0 %v650
      %v869 = vpop.f32.mrb[0].mxu0
      %v870 = vadd.f32 %v569, %v869
      %v871 = vpop.f32.mrb[0].mxu0
      %v872 = vpop.f32.mrb[0].mxu0
      %v873 = vadd.f32 %v569, %v872
      %v874 = vpop.f32.mrb[0].mxu0
      %875 = vdwg.mxu0
      %v876 = vtanh.pop %v750
      %v877 = vtanh.pop %v753
      %v878 = vtanh.pop %v758
      %v879 = vtanh.pop %v761
      %v880 = vtanh.pop %v766
      %v881 = vtanh.pop %v769
      %v882 = vtanh.pop %v774
      %v883 = vtanh.pop %v777
      %v884 = vtanh.pop %v782
      %v885 = vtanh.pop %v785
      %v886 = vtanh.pop %v790
      %v887 = vtanh.pop %v793
      %v888 = vtanh.pop %v798
      %v889 = vtanh.pop %v801
      %v890 = vtanh.pop %v806
      %v891 = vtanh.pop %v809
      %v892 = vtanh.pop %v814
      %v893 = vtanh.pop %v817
      %v894 = vtanh.pop %v822
      %v895 = vtanh.pop %v825
      %v896 = vtanh.pop %v830
      %v897 = vtanh.pop %v833
      %v898 = vtanh.pop %v838
      %v899 = vtanh.pop %v841
      %v900 = vtanh.pop %v846
      %v901 = vtanh.pop %v849
      %v902 = vtanh.pop %v854
      %v903 = vtanh.pop %v857
      %v904 = vtanh.pop %v862
      %v905 = vtanh.pop %v865
      %v906 = vtanh.pop %v870
      %v907 = vtanh.pop %v873
      %v908 = vpack.c.bf16 %v877, %v876
      %v909 = vpack.c.bf16 %v879, %v878
      %v910 = vpack.c.bf16 %v881, %v880
      %v911 = vpack.c.bf16 %v883, %v882
      %v912 = vpack.c.bf16 %v885, %v884
      %v913 = vpack.c.bf16 %v887, %v886
      %v914 = vpack.c.bf16 %v889, %v888
      %v915 = vpack.c.bf16 %v891, %v890
      %v916 = vpack.c.bf16 %v893, %v892
      %v917 = vpack.c.bf16 %v895, %v894
      %v918 = vpack.c.bf16 %v897, %v896
      %v919 = vpack.c.bf16 %v899, %v898
      %v920 = vpack.c.bf16 %v901, %v900
      %v921 = vpack.c.bf16 %v903, %v902
      %v922 = vpack.c.bf16 %v905, %v904
      %v923 = vpack.c.bf16 %v907, %v906
      %v940 = vunpack.c.l.b16 %v908
      %v941 = vunpack.c.h.b16 %v908
      %v942 = vunpack.c.l.b16 %v909
      %v943 = vunpack.c.h.b16 %v909
      %v944 = vunpack.c.l.b16 %v910
      %v945 = vunpack.c.h.b16 %v910
      %v946 = vunpack.c.l.b16 %v911
      %v947 = vunpack.c.h.b16 %v911
      %v948 = vunpack.c.l.b16 %v912
      %v949 = vunpack.c.h.b16 %v912
      %v950 = vunpack.c.l.b16 %v913
      %v951 = vunpack.c.h.b16 %v913
      %v952 = vunpack.c.l.b16 %v914
      %v953 = vunpack.c.h.b16 %v914
      %v954 = vunpack.c.l.b16 %v915
      %v955 = vunpack.c.h.b16 %v915
      %v956 = vunpack.c.l.b16 %v916
      %v957 = vunpack.c.h.b16 %v916
      %v958 = vunpack.c.l.b16 %v917
      %v959 = vunpack.c.h.b16 %v917
      %v960 = vunpack.c.l.b16 %v918
      %v961 = vunpack.c.h.b16 %v918
      %v962 = vunpack.c.l.b16 %v919
      %v963 = vunpack.c.h.b16 %v919
      %v964 = vunpack.c.l.b16 %v920
      %v965 = vunpack.c.h.b16 %v920
      %v966 = vunpack.c.l.b16 %v921
      %v967 = vunpack.c.h.b16 %v921
      %v968 = vunpack.c.l.b16 %v922
      %v969 = vunpack.c.h.b16 %v922
      %v970 = vunpack.c.l.b16 %v923
      %v971 = vunpack.c.h.b16 %v923
      %v972 = vpack.c.b16 %v940, %v940
      %v973 = vpack.c.b16 %v941, %v941
      %v974 = vpack.c.b16 %v942, %v942
      %v975 = vpack.c.b16 %v943, %v943
      %v976 = vpack.c.b16 %v944, %v944
      %v977 = vpack.c.b16 %v945, %v945
      %v978 = vpack.c.b16 %v946, %v946
      %v979 = vpack.c.b16 %v947, %v947
      %v980 = vpack.c.b16 %v948, %v948
      %v981 = vpack.c.b16 %v949, %v949
      %v982 = vpack.c.b16 %v950, %v950
      %v983 = vpack.c.b16 %v951, %v951
      %v984 = vpack.c.b16 %v952, %v952
      %v985 = vpack.c.b16 %v953, %v953
      %v986 = vpack.c.b16 %v954, %v954
      %v987 = vpack.c.b16 %v955, %v955
      %v988 = vpack.c.b16 %v956, %v956
      %v989 = vpack.c.b16 %v957, %v957
      %v990 = vpack.c.b16 %v958, %v958
      %v991 = vpack.c.b16 %v959, %v959
      %v992 = vpack.c.b16 %v960, %v960
      %v993 = vpack.c.b16 %v961, %v961
      %v994 = vpack.c.b16 %v962, %v962
      %v995 = vpack.c.b16 %v963, %v963
      %v996 = vpack.c.b16 %v964, %v964
      %v997 = vpack.c.b16 %v965, %v965
      %v998 = vpack.c.b16 %v966, %v966
      %v999 = vpack.c.b16 %v967, %v967
      %v1000 = vpack.c.b16 %v968, %v968
      %v1001 = vpack.c.b16 %v969, %v969
      %v1002 = vpack.c.b16 %v970, %v970
      %v1003 = vpack.c.b16 %v971, %v971
      %1036 = vst [vmem:[#allocation8] sm:$0xf] %v972
      %1037 = vst [vmem:[#allocation8 + $0x4] sm:$0xf] %v973
      %1038 = vst [vmem:[#allocation8 + $0x8] sm:$0xf] %v974
      %1039 = vst [vmem:[#allocation8 + $0xc] sm:$0xf] %v975
      %1040 = vst [vmem:[#allocation8 + $0x10] sm:$0xf] %v976
      %1041 = vst [vmem:[#allocation8 + $0x14] sm:$0xf] %v977
      %1042 = vst [vmem:[#allocation8 + $0x18] sm:$0xf] %v978
      %1043 = vst [vmem:[#allocation8 + $0x1c] sm:$0xf] %v979
      %1044 = vst [vmem:[#allocation8 + $0x20] sm:$0xf] %v980
      %1045 = vst [vmem:[#allocation8 + $0x24] sm:$0xf] %v981
      %1046 = vst [vmem:[#allocation8 + $0x28] sm:$0xf] %v982
      %1047 = vst [vmem:[#allocation8 + $0x2c] sm:$0xf] %v983
      %1048 = vst [vmem:[#allocation8 + $0x30] sm:$0xf] %v984
      %1049 = vst [vmem:[#allocation8 + $0x34] sm:$0xf] %v985
      %1050 = vst [vmem:[#allocation8 + $0x38] sm:$0xf] %v986
      %1051 = vst [vmem:[#allocation8 + $0x3c] sm:$0xf] %v987
      %1052 = vst [vmem:[#allocation8 + $0x40] sm:$0xf] %v988
      %1053 = vst [vmem:[#allocation8 + $0x44] sm:$0xf] %v989
      %1054 = vst [vmem:[#allocation8 + $0x48] sm:$0xf] %v990
      %1055 = vst [vmem:[#allocation8 + $0x4c] sm:$0xf] %v991
      %1056 = vst [vmem:[#allocation8 + $0x50] sm:$0xf] %v992
      %1057 = vst [vmem:[#allocation8 + $0x54] sm:$0xf] %v993
      %1058 = vst [vmem:[#allocation8 + $0x58] sm:$0xf] %v994
      %1059 = vst [vmem:[#allocation8 + $0x5c] sm:$0xf] %v995
      %1060 = vst [vmem:[#allocation8 + $0x60] sm:$0xf] %v996
      %1061 = vst [vmem:[#allocation8 + $0x64] sm:$0xf] %v997
      %1062 = vst [vmem:[#allocation8 + $0x68] sm:$0xf] %v998
      %1063 = vst [vmem:[#allocation8 + $0x6c] sm:$0xf] %v999
      %1064 = vst [vmem:[#allocation8 + $0x70] sm:$0xf] %v1000
      %1065 = vst [vmem:[#allocation8 + $0x74] sm:$0xf] %v1001
      %1066 = vst [vmem:[#allocation8 + $0x78] sm:$0xf] %v1002
      %1067 = vst [vmem:[#allocation8 + $0x7c] sm:$0xf] %v1003
      %v1068 = vld [vmem:[%s6] sm:$0x1]
      %v1070 = vlaneseq
      %v1071 = vshrl.u32 %v1070, 7
      %v1072 = vsub.s32 0, %v1071
      %v1073 = vrot.slane %v1068, %v1072
      %v1075 = vmul.f32 %v876, %v1073
      %v1076 = vmul.f32 %v877, %v1073
      %v1077 = vmul.f32 %v878, %v1073
      %v1078 = vmul.f32 %v879, %v1073
      %v1079 = vmul.f32 %v880, %v1073
      %v1080 = vmul.f32 %v881, %v1073
      %v1081 = vmul.f32 %v882, %v1073
      %v1082 = vmul.f32 %v883, %v1073
      %v1083 = vmul.f32 %v884, %v1073
      %v1084 = vmul.f32 %v885, %v1073
      %v1085 = vmul.f32 %v886, %v1073
      %v1086 = vmul.f32 %v887, %v1073
      %v1087 = vmul.f32 %v888, %v1073
      %v1088 = vmul.f32 %v889, %v1073
      %v1089 = vmul.f32 %v890, %v1073
      %v1090 = vmul.f32 %v891, %v1073
      %v1091 = vmul.f32 %v892, %v1073
      %v1092 = vmul.f32 %v893, %v1073
      %v1093 = vmul.f32 %v894, %v1073
      %v1094 = vmul.f32 %v895, %v1073
      %v1095 = vmul.f32 %v896, %v1073
      %v1096 = vmul.f32 %v897, %v1073
      %v1097 = vmul.f32 %v898, %v1073
      %v1098 = vmul.f32 %v899, %v1073
      %v1099 = vmul.f32 %v900, %v1073
      %v1100 = vmul.f32 %v901, %v1073
      %v1101 = vmul.f32 %v902, %v1073
      %v1102 = vmul.f32 %v903, %v1073
      %v1103 = vmul.f32 %v904, %v1073
      %v1104 = vmul.f32 %v905, %v1073
      %v1105 = vmul.f32 %v906, %v1073
      %v1106 = vmul.f32 %v907, %v1073
      %1107 = vadd.xlane.f32.xlu0 %v1075
      %v1108 = vpop.xlane.xlu0 %1107
      %1109 = vadd.xlane.f32.xlu0 %v1076
      %v1110 = vpop.xlane.xlu0 %1109
      %1111 = vadd.xlane.f32.xlu0 %v1077
      %v1112 = vpop.xlane.xlu0 %1111
      %1113 = vadd.xlane.f32.xlu0 %v1078
      %v1114 = vpop.xlane.xlu0 %1113
      %1115 = vadd.xlane.f32.xlu0 %v1079
      %v1116 = vpop.xlane.xlu0 %1115
      %1117 = vadd.xlane.f32.xlu0 %v1080
      %v1118 = vpop.xlane.xlu0 %1117
      %1119 = vadd.xlane.f32.xlu0 %v1081
      %v1120 = vpop.xlane.xlu0 %1119
      %1121 = vadd.xlane.f32.xlu0 %v1082
      %v1122 = vpop.xlane.xlu0 %1121
      %1123 = vadd.xlane.f32.xlu0 %v1083
      %v1124 = vpop.xlane.xlu0 %1123
      %1125 = vadd.xlane.f32.xlu0 %v1084
      %v1126 = vpop.xlane.xlu0 %1125
      %1127 = vadd.xlane.f32.xlu0 %v1085
      %v1128 = vpop.xlane.xlu0 %1127
      %1129 = vadd.xlane.f32.xlu0 %v1086
      %v1130 = vpop.xlane.xlu0 %1129
      %1131 = vadd.xlane.f32.xlu0 %v1087
      %v1132 = vpop.xlane.xlu0 %1131
      %1133 = vadd.xlane.f32.xlu0 %v1088
      %v1134 = vpop.xlane.xlu0 %1133
      %1135 = vadd.xlane.f32.xlu0 %v1089
      %v1136 = vpop.xlane.xlu0 %1135
      %1137 = vadd.xlane.f32.xlu0 %v1090
      %v1138 = vpop.xlane.xlu0 %1137
      %1139 = vadd.xlane.f32.xlu0 %v1091
      %v1140 = vpop.xlane.xlu0 %1139
      %1141 = vadd.xlane.f32.xlu0 %v1092
      %v1142 = vpop.xlane.xlu0 %1141
      %1143 = vadd.xlane.f32.xlu0 %v1093
      %v1144 = vpop.xlane.xlu0 %1143
      %1145 = vadd.xlane.f32.xlu0 %v1094
      %v1146 = vpop.xlane.xlu0 %1145
      %1147 = vadd.xlane.f32.xlu0 %v1095
      %v1148 = vpop.xlane.xlu0 %1147
      %1149 = vadd.xlane.f32.xlu0 %v1096
      %v1150 = vpop.xlane.xlu0 %1149
      %1151 = vadd.xlane.f32.xlu0 %v1097
      %v1152 = vpop.xlane.xlu0 %1151
      %1153 = vadd.xlane.f32.xlu0 %v1098
      %v1154 = vpop.xlane.xlu0 %1153
      %1155 = vadd.xlane.f32.xlu0 %v1099
      %v1156 = vpop.xlane.xlu0 %1155
      %1157 = vadd.xlane.f32.xlu0 %v1100
      %v1158 = vpop.xlane.xlu0 %1157
      %1159 = vadd.xlane.f32.xlu0 %v1101
      %v1160 = vpop.xlane.xlu0 %1159
      %1161 = vadd.xlane.f32.xlu0 %v1102
      %v1162 = vpop.xlane.xlu0 %1161
      %1163 = vadd.xlane.f32.xlu0 %v1103
      %v1164 = vpop.xlane.xlu0 %1163
      %1165 = vadd.xlane.f32.xlu0 %v1104
      %v1166 = vpop.xlane.xlu0 %1165
      %1167 = vadd.xlane.f32.xlu0 %v1105
      %v1168 = vpop.xlane.xlu0 %1167
      %1169 = vadd.xlane.f32.xlu0 %v1106
      %v1170 = vpop.xlane.xlu0 %1169
      %s1171 = sld [smem:[#allocation2]]
      %v1172 = vstv %s1171
      %v1173 = vadd.f32 %v1108, %v1172
      %v1174 = vadd.f32 %v1110, %v1172
      %v1175 = vadd.f32 %v1112, %v1172
      %v1176 = vadd.f32 %v1114, %v1172
      %v1177 = vadd.f32 %v1116, %v1172
      %v1178 = vadd.f32 %v1118, %v1172
      %v1179 = vadd.f32 %v1120, %v1172
      %v1180 = vadd.f32 %v1122, %v1172
      %v1181 = vadd.f32 %v1124, %v1172
      %v1182 = vadd.f32 %v1126, %v1172
      %v1183 = vadd.f32 %v1128, %v1172
      %v1184 = vadd.f32 %v1130, %v1172
      %v1185 = vadd.f32 %v1132, %v1172
      %v1186 = vadd.f32 %v1134, %v1172
      %v1187 = vadd.f32 %v1136, %v1172
      %v1188 = vadd.f32 %v1138, %v1172
      %v1189 = vadd.f32 %v1140, %v1172
      %v1190 = vadd.f32 %v1142, %v1172
      %v1191 = vadd.f32 %v1144, %v1172
      %v1192 = vadd.f32 %v1146, %v1172
      %v1193 = vadd.f32 %v1148, %v1172
      %v1194 = vadd.f32 %v1150, %v1172
      %v1195 = vadd.f32 %v1152, %v1172
      %v1196 = vadd.f32 %v1154, %v1172
      %v1197 = vadd.f32 %v1156, %v1172
      %v1198 = vadd.f32 %v1158, %v1172
      %v1199 = vadd.f32 %v1160, %v1172
      %v1200 = vadd.f32 %v1162, %v1172
      %v1201 = vadd.f32 %v1164, %v1172
      %v1202 = vadd.f32 %v1166, %v1172
      %v1203 = vadd.f32 %v1168, %v1172
      %v1204 = vadd.f32 %v1170, %v1172
      %vm1205 = vcmask 7168
      %1206 = vst.msk [vmem:[%s10] sm:$0xff] %vm1205, %v1173
      %1207 = vst.msk [vmem:[%s10 + $0x8] sm:$0xff] %vm1205, %v1174
      %1208 = vst.msk [vmem:[%s10 + $0x10] sm:$0xff] %vm1205, %v1175
      %1209 = vst.msk [vmem:[%s10 + $0x18] sm:$0xff] %vm1205, %v1176
      %1210 = vst.msk [vmem:[%s10 + $0x20] sm:$0xff] %vm1205, %v1177
      %1211 = vst.msk [vmem:[%s10 + $0x28] sm:$0xff] %vm1205, %v1178
      %1212 = vst.msk [vmem:[%s10 + $0x30] sm:$0xff] %vm1205, %v1179
      %1213 = vst.msk [vmem:[%s10 + $0x38] sm:$0xff] %vm1205, %v1180
      %1214 = vst.msk [vmem:[%s10 + $0x40] sm:$0xff] %vm1205, %v1181
      %1215 = vst.msk [vmem:[%s10 + $0x48] sm:$0xff] %vm1205, %v1182
      %1216 = vst.msk [vmem:[%s10 + $0x50] sm:$0xff] %vm1205, %v1183
      %1217 = vst.msk [vmem:[%s10 + $0x58] sm:$0xff] %vm1205, %v1184
      %1218 = vst.msk [vmem:[%s10 + $0x60] sm:$0xff] %vm1205, %v1185
      %1219 = vst.msk [vmem:[%s10 + $0x68] sm:$0xff] %vm1205, %v1186
      %1220 = vst.msk [vmem:[%s10 + $0x70] sm:$0xff] %vm1205, %v1187
      %1221 = vst.msk [vmem:[%s10 + $0x78] sm:$0xff] %vm1205, %v1188
      %1222 = vst.msk [vmem:[%s10 + $0x80] sm:$0xff] %vm1205, %v1189
      %1223 = vst.msk [vmem:[%s10 + $0x88] sm:$0xff] %vm1205, %v1190
      %1224 = vst.msk [vmem:[%s10 + $0x90] sm:$0xff] %vm1205, %v1191
      %1225 = vst.msk [vmem:[%s10 + $0x98] sm:$0xff] %vm1205, %v1192
      %1226 = vst.msk [vmem:[%s10 + $0xa0] sm:$0xff] %vm1205, %v1193
      %1227 = vst.msk [vmem:[%s10 + $0xa8] sm:$0xff] %vm1205, %v1194
      %1228 = vst.msk [vmem:[%s10 + $0xb0] sm:$0xff] %vm1205, %v1195
      %1229 = vst.msk [vmem:[%s10 + $0xb8] sm:$0xff] %vm1205, %v1196
      %1230 = vst.msk [vmem:[%s10 + $0xc0] sm:$0xff] %vm1205, %v1197
      %1231 = vst.msk [vmem:[%s10 + $0xc8] sm:$0xff] %vm1205, %v1198
      %1232 = vst.msk [vmem:[%s10 + $0xd0] sm:$0xff] %vm1205, %v1199
      %1233 = vst.msk [vmem:[%s10 + $0xd8] sm:$0xff] %vm1205, %v1200
      %1234 = vst.msk [vmem:[%s10 + $0xe0] sm:$0xff] %vm1205, %v1201
      %1235 = vst.msk [vmem:[%s10 + $0xe8] sm:$0xff] %vm1205, %v1202
      %1236 = vst.msk [vmem:[%s10 + $0xf0] sm:$0xff] %vm1205, %v1203
      %1237 = vst.msk [vmem:[%s10 + $0xf8] sm:$0xff] %vm1205, %v1204
    $region45: #{tpu_custom_call.1} parent=1 // pred_fallthru
      _
    %v1238 = vld [vmem:[#allocation8] sm:$0xf]
    %v1239 = vld [vmem:[#allocation8 + $0x4] sm:$0xf]
    %v1240 = vld [vmem:[#allocation8 + $0x8] sm:$0xf]
    %v1241 = vld [vmem:[#allocation8 + $0xc] sm:$0xf]
    %v1242 = vld [vmem:[#allocation8 + $0x10] sm:$0xf]
    %v1243 = vld [vmem:[#allocation8 + $0x14] sm:$0xf]
    %v1244 = vld [vmem:[#allocation8 + $0x18] sm:$0xf]
    %v1245 = vld [vmem:[#allocation8 + $0x1c] sm:$0xf]
    %v1246 = vld [vmem:[#allocation8 + $0x20] sm:$0xf]
    %v1247 = vld [vmem:[#allocation8 + $0x24] sm:$0xf]
    %v1248 = vld [vmem:[#allocation8 + $0x28] sm:$0xf]
    %v1249 = vld [vmem:[#allocation8 + $0x2c] sm:$0xf]
    %v1250 = vld [vmem:[#allocation8 + $0x30] sm:$0xf]
    %v1251 = vld [vmem:[#allocation8 + $0x34] sm:$0xf]
    %v1252 = vld [vmem:[#allocation8 + $0x38] sm:$0xf]
    %v1253 = vld [vmem:[#allocation8 + $0x3c] sm:$0xf]
    %v1254 = vld [vmem:[#allocation8 + $0x40] sm:$0xf]
    %v1255 = vld [vmem:[#allocation8 + $0x44] sm:$0xf]
    %v1256 = vld [vmem:[#allocation8 + $0x48] sm:$0xf]
    %v1257 = vld [vmem:[#allocation8 + $0x4c] sm:$0xf]
    %v1258 = vld [vmem:[#allocation8 + $0x50] sm:$0xf]
    %v1259 = vld [vmem:[#allocation8 + $0x54] sm:$0xf]
    %v1260 = vld [vmem:[#allocation8 + $0x58] sm:$0xf]
    %v1261 = vld [vmem:[#allocation8 + $0x5c] sm:$0xf]
    %v1262 = vld [vmem:[#allocation8 + $0x60] sm:$0xf]
    %v1263 = vld [vmem:[#allocation8 + $0x64] sm:$0xf]
    %v1264 = vld [vmem:[#allocation8 + $0x68] sm:$0xf]
    %v1265 = vld [vmem:[#allocation8 + $0x6c] sm:$0xf]
    %v1266 = vld [vmem:[#allocation8 + $0x70] sm:$0xf]
    %v1267 = vld [vmem:[#allocation8 + $0x74] sm:$0xf]
    %v1268 = vld [vmem:[#allocation8 + $0x78] sm:$0xf]
    %v1269 = vld [vmem:[#allocation8 + $0x7c] sm:$0xf]
    %v1270 = vld [vmem:[#allocation6] sm:$0xff]
    %v1271 = vld [vmem:[#allocation6 + $0x8] sm:$0xff]
    %v1272 = vld [vmem:[#allocation6 + $0x10] sm:$0xff]
    %v1273 = vld [vmem:[#allocation6 + $0x18] sm:$0xff]
    %v1274 = vld [vmem:[#allocation6 + $0x20] sm:$0xff]
    %v1275 = vld [vmem:[#allocation6 + $0x28] sm:$0xff]
    %v1276 = vld [vmem:[#allocation6 + $0x30] sm:$0xff]
    %v1277 = vld [vmem:[#allocation6 + $0x38] sm:$0xff]
    %v1278 = vld [vmem:[#allocation6 + $0x40] sm:$0xff]
    %v1279 = vld [vmem:[#allocation6 + $0x48] sm:$0xff]
    %v1280 = vld [vmem:[#allocation6 + $0x50] sm:$0xff]
    %v1281 = vld [vmem:[#allocation6 + $0x58] sm:$0xff]
    %v1282 = vld [vmem:[#allocation6 + $0x60] sm:$0xff]
    %v1283 = vld [vmem:[#allocation6 + $0x68] sm:$0xff]
    %v1284 = vld [vmem:[#allocation6 + $0x70] sm:$0xff]
    %v1285 = vld [vmem:[#allocation6 + $0x78] sm:$0xff]
    %v1286 = vld [vmem:[#allocation6 + $0x80] sm:$0xff]
    %v1287 = vld [vmem:[#allocation6 + $0x88] sm:$0xff]
    %v1288 = vld [vmem:[#allocation6 + $0x90] sm:$0xff]
    %v1289 = vld [vmem:[#allocation6 + $0x98] sm:$0xff]
    %v1290 = vld [vmem:[#allocation6 + $0xa0] sm:$0xff]
    %v1291 = vld [vmem:[#allocation6 + $0xa8] sm:$0xff]
    %v1292 = vld [vmem:[#allocation6 + $0xb0] sm:$0xff]
    %v1293 = vld [vmem:[#allocation6 + $0xb8] sm:$0xff]
    %v1294 = vld [vmem:[#allocation6 + $0xc0] sm:$0xff]
    %v1295 = vld [vmem:[#allocation6 + $0xc8] sm:$0xff]
    %v1296 = vld [vmem:[#allocation6 + $0xd0] sm:$0xff]
    %v1297 = vld [vmem:[#allocation6 + $0xd8] sm:$0xff]
    %v1298 = vld [vmem:[#allocation6 + $0xe0] sm:$0xff]
    %v1299 = vld [vmem:[#allocation6 + $0xe8] sm:$0xff]
    %v1300 = vld [vmem:[#allocation6 + $0xf0] sm:$0xff]
    %v1301 = vld [vmem:[#allocation6 + $0xf8] sm:$0xff]
    %v1302 = vld [vmem:[%s5] sm:$0xf]
    %v1304 = vlaneseq
    %v1305 = vshrl.u32 %v1304, 7
    %v1306 = vsub.s32 0, %v1305
    %v1307 = vrot.slane %v1302, %v1306
    %v1308 = vlaneseq
    %v1309 = vshrl.u32 %v1308, 7
    %v1310 = vsub.s32 1, %v1309
    %v1311 = vrot.slane %v1302, %v1310
    %v1312 = vlaneseq
    %v1313 = vshrl.u32 %v1312, 7
    %v1314 = vsub.s32 2, %v1313
    %v1315 = vrot.slane %v1302, %v1314
    %v1316 = vlaneseq
    %v1317 = vshrl.u32 %v1316, 7
    %v1318 = vsub.s32 3, %v1317
    %v1319 = vrot.slane %v1302, %v1318
    %v1356 = vunpack.c.l.b16 %v1238
    %v1357 = vunpack.c.l.b16 %v1239
    %v1358 = vunpack.c.l.b16 %v1240
    %v1359 = vunpack.c.l.b16 %v1241
    %v1360 = vunpack.c.l.b16 %v1242
    %v1361 = vunpack.c.l.b16 %v1243
    %v1362 = vunpack.c.l.b16 %v1244
    %v1363 = vunpack.c.l.b16 %v1245
    %v1364 = vunpack.c.l.b16 %v1246
    %v1365 = vunpack.c.l.b16 %v1247
    %v1366 = vunpack.c.l.b16 %v1248
    %v1367 = vunpack.c.l.b16 %v1249
    %v1368 = vunpack.c.l.b16 %v1250
    %v1369 = vunpack.c.l.b16 %v1251
    %v1370 = vunpack.c.l.b16 %v1252
    %v1371 = vunpack.c.l.b16 %v1253
    %v1372 = vunpack.c.l.b16 %v1254
    %v1373 = vunpack.c.l.b16 %v1255
    %v1374 = vunpack.c.l.b16 %v1256
    %v1375 = vunpack.c.l.b16 %v1257
    %v1376 = vunpack.c.l.b16 %v1258
    %v1377 = vunpack.c.l.b16 %v1259
    %v1378 = vunpack.c.l.b16 %v1260
    %v1379 = vunpack.c.l.b16 %v1261
    %v1380 = vunpack.c.l.b16 %v1262
    %v1381 = vunpack.c.l.b16 %v1263
    %v1382 = vunpack.c.l.b16 %v1264
    %v1383 = vunpack.c.l.b16 %v1265
    %v1384 = vunpack.c.l.b16 %v1266
    %v1385 = vunpack.c.l.b16 %v1267
    %v1386 = vunpack.c.l.b16 %v1268
    %v1387 = vunpack.c.l.b16 %v1269
    %v1388 = vpack.c.b16 %v1357, %v1356
    %v1389 = vpack.c.b16 %v1359, %v1358
    %v1390 = vpack.c.b16 %v1361, %v1360
    %v1391 = vpack.c.b16 %v1363, %v1362
    %v1392 = vpack.c.b16 %v1365, %v1364
    %v1393 = vpack.c.b16 %v1367, %v1366
    %v1394 = vpack.c.b16 %v1369, %v1368
    %v1395 = vpack.c.b16 %v1371, %v1370
    %v1396 = vpack.c.b16 %v1373, %v1372
    %v1397 = vpack.c.b16 %v1375, %v1374
    %v1398 = vpack.c.b16 %v1377, %v1376
    %v1399 = vpack.c.b16 %v1379, %v1378
    %v1400 = vpack.c.b16 %v1381, %v1380
    %v1401 = vpack.c.b16 %v1383, %v1382
    %v1402 = vpack.c.b16 %v1385, %v1384
    %v1403 = vpack.c.b16 %v1387, %v1386
    %v1452 = vunpack.c.l.b16 %v1270
    %v1453 = vunpack.c.h.b16 %v1270
    %v1454 = vunpack.c.l.b16 %v1271
    %v1455 = vunpack.c.h.b16 %v1271
    %v1456 = vunpack.c.l.b16 %v1272
    %v1457 = vunpack.c.h.b16 %v1272
    %v1458 = vunpack.c.l.b16 %v1273
    %v1459 = vunpack.c.h.b16 %v1273
    %v1460 = vunpack.c.l.b16 %v1274
    %v1461 = vunpack.c.h.b16 %v1274
    %v1462 = vunpack.c.l.b16 %v1275
    %v1463 = vunpack.c.h.b16 %v1275
    %v1464 = vunpack.c.l.b16 %v1276
    %v1465 = vunpack.c.h.b16 %v1276
    %v1466 = vunpack.c.l.b16 %v1277
    %v1467 = vunpack.c.h.b16 %v1277
    %v1468 = vunpack.c.l.b16 %v1278
    %v1469 = vunpack.c.h.b16 %v1278
    %v1470 = vunpack.c.l.b16 %v1279
    %v1471 = vunpack.c.h.b16 %v1279
    %v1472 = vunpack.c.l.b16 %v1280
    %v1473 = vunpack.c.h.b16 %v1280
    %v1474 = vunpack.c.l.b16 %v1281
    %v1475 = vunpack.c.h.b16 %v1281
    %v1476 = vunpack.c.l.b16 %v1282
    %v1477 = vunpack.c.h.b16 %v1282
    %v1478 = vunpack.c.l.b16 %v1283
    %v1479 = vunpack.c.h.b16 %v1283
    %v1480 = vunpack.c.l.b16 %v1284
    %v1481 = vunpack.c.h.b16 %v1284
    %v1482 = vunpack.c.l.b16 %v1285
    %v1483 = vunpack.c.h.b16 %v1285
    %v1484 = vunpack.c.l.b16 %v1286
    %v1485 = vunpack.c.h.b16 %v1286
    %v1486 = vunpack.c.l.b16 %v1287
    %v1487 = vunpack.c.h.b16 %v1287
    %v1488 = vunpack.c.l.b16 %v1288
    %v1489 = vunpack.c.h.b16 %v1288
    %v1490 = vunpack.c.l.b16 %v1289
    %v1491 = vunpack.c.h.b16 %v1289
    %v1492 = vunpack.c.l.b16 %v1290
    %v1493 = vunpack.c.h.b16 %v1290
    %v1494 = vunpack.c.l.b16 %v1291
    %v1495 = vunpack.c.h.b16 %v1291
    %v1496 = vunpack.c.l.b16 %v1292
    %v1497 = vunpack.c.h.b16 %v1292
    %v1498 = vunpack.c.l.b16 %v1293
    %v1499 = vunpack.c.h.b16 %v1293
    %v1500 = vunpack.c.l.b16 %v1294
    %v1501 = vunpack.c.h.b16 %v1294
    %v1502 = vunpack.c.l.b16 %v1295
    %v1503 = vunpack.c.h.b16 %v1295
    %v1504 = vunpack.c.l.b16 %v1296
    %v1505 = vunpack.c.h.b16 %v1296
    %v1506 = vunpack.c.l.b16 %v1297
    %v1507 = vunpack.c.h.b16 %v1297
    %v1508 = vunpack.c.l.b16 %v1298
    %v1509 = vunpack.c.h.b16 %v1298
    %v1510 = vunpack.c.l.b16 %v1299
    %v1511 = vunpack.c.h.b16 %v1299
    %v1512 = vunpack.c.l.b16 %v1300
    %v1513 = vunpack.c.h.b16 %v1300
    %v1514 = vunpack.c.l.b16 %v1301
    %v1515 = vunpack.c.h.b16 %v1301
    %v1516 = vpack.c.b16 %v1456, %v1452
    %v1517 = vpack.c.b16 %v1457, %v1453
    %v1518 = vpack.c.b16 %v1458, %v1454
    %v1519 = vpack.c.b16 %v1459, %v1455
    %v1520 = vpack.c.b16 %v1464, %v1460
    %v1521 = vpack.c.b16 %v1465, %v1461
    %v1522 = vpack.c.b16 %v1466, %v1462
    %v1523 = vpack.c.b16 %v1467, %v1463
    %v1524 = vpack.c.b16 %v1472, %v1468
    %v1525 = vpack.c.b16 %v1473, %v1469
    %v1526 = vpack.c.b16 %v1474, %v1470
    %v1527 = vpack.c.b16 %v1475, %v1471
    %v1528 = vpack.c.b16 %v1480, %v1476
    %v1529 = vpack.c.b16 %v1481, %v1477
    %v1530 = vpack.c.b16 %v1482, %v1478
    %v1531 = vpack.c.b16 %v1483, %v1479
    %v1532 = vpack.c.b16 %v1488, %v1484
    %v1533 = vpack.c.b16 %v1489, %v1485
    %v1534 = vpack.c.b16 %v1490, %v1486
    %v1535 = vpack.c.b16 %v1491, %v1487
    %v1536 = vpack.c.b16 %v1496, %v1492
    %v1537 = vpack.c.b16 %v1497, %v1493
    %v1538 = vpack.c.b16 %v1498, %v1494
    %v1539 = vpack.c.b16 %v1499, %v1495
    %v1540 = vpack.c.b16 %v1504, %v1500
    %v1541 = vpack.c.b16 %v1505, %v1501
    %v1542 = vpack.c.b16 %v1506, %v1502
    %v1543 = vpack.c.b16 %v1507, %v1503
    %v1544 = vpack.c.b16 %v1512, %v1508
    %v1545 = vpack.c.b16 %v1513, %v1509
    %v1546 = vpack.c.b16 %v1514, %v1510
    %v1547 = vpack.c.b16 %v1515, %v1511
    %1580 = vmatprep.subr.bf16.mxu0 %v1517
    %1581 = vmatpush1.bf16.msra.mxu0 %v1516
    %1582 = vmatprep.subr.bf16.mxu0 %v1521
    %1583 = vmatpush1.bf16.msra.mxu0 %v1520
    %1584 = vmatprep.subr.bf16.mxu0 %v1525
    %1585 = vmatpush1.bf16.msra.mxu0 %v1524
    %1586 = vmatprep.subr.bf16.mxu0 %v1529
    %1587 = vmatpush1.bf16.msra.mxu0 %v1528
    %1588 = vmatprep.subr.bf16.mxu0 %v1533
    %1589 = vmatpush1.bf16.msra.mxu0 %v1532
    %1590 = vmatprep.subr.bf16.mxu0 %v1537
    %1591 = vmatpush1.bf16.msra.mxu0 %v1536
    %1592 = vmatprep.subr.bf16.mxu0 %v1541
    %1593 = vmatpush1.bf16.msra.mxu0 %v1540
    %1594 = vmatprep.subr.bf16.mxu0 %v1545
    %1595 = vmatpush1.bf16.msra.mxu0 %v1544
    %1596 = vmatprep.subr.bf16.mxu0 0
    %1597 = vmatpush1.bf16.msra.mxu0 0
    %1598 = vmatprep.subr.bf16.mxu0 0
    %1599 = vmatpush1.bf16.msra.mxu0 0
    %1600 = vmatprep.subr.bf16.mxu0 0
    %1601 = vmatpush1.bf16.msra.mxu0 0
    %1602 = vmatprep.subr.bf16.mxu0 0
    %1603 = vmatpush1.bf16.msra.mxu0 0
    %1604 = vmatprep.subr.bf16.mxu0 0
    %1605 = vmatpush1.bf16.msra.mxu0 0
    %1606 = vmatprep.subr.bf16.mxu0 0
    %1607 = vmatpush1.bf16.msra.mxu0 0
    %1608 = vmatprep.subr.bf16.mxu0 0
    %1609 = vmatpush1.bf16.msra.mxu0 0
    %1610 = vmatprep.subr.bf16.mxu0 0
    %1611 = vmatpush1.bf16.msra.mxu0 0
    %1612 = vmatprep.mubr.bf16.mxu0 0
    %1613 = vmatmul.mubr.bf16.gmra.mrb[0].mxu0 %v1388
    %v1614 = vpop.f32.mrb[0].mxu0
    %v1615 = vadd.f32 %v1307, %v1614
    %v1616 = vpop.f32.mrb[0].mxu0
    %v1617 = vadd.f32 %v1311, %v1616
    %v1618 = vpop.f32.mrb[0].mxu0
    %v1619 = vadd.f32 %v1307, %v1618
    %v1620 = vpop.f32.mrb[0].mxu0
    %v1621 = vadd.f32 %v1311, %v1620
    %1622 = vmatprep.mubr.bf16.mxu0 0
    %1623 = vmatmul.mubr.bf16.gmra.mrb[0].mxu0 %v1389
    %v1624 = vpop.f32.mrb[0].mxu0
    %v1625 = vadd.f32 %v1307, %v1624
    %v1626 = vpop.f32.mrb[0].mxu0
    %v1627 = vadd.f32 %v1311, %v1626
    %v1628 = vpop.f32.mrb[0].mxu0
    %v1629 = vadd.f32 %v1307, %v1628
    %v1630 = vpop.f32.mrb[0].mxu0
    %v1631 = vadd.f32 %v1311, %v1630
    %1632 = vmatprep.mubr.bf16.mxu0 0
    %1633 = vmatmul.mubr.bf16.gmra.mrb[0].mxu0 %v1390
    %v1634 = vpop.f32.mrb[0].mxu0
    %v1635 = vadd.f32 %v1307, %v1634
    %v1636 = vpop.f32.mrb[0].mxu0
    %v1637 = vadd.f32 %v1311, %v1636
    %v1638 = vpop.f32.mrb[0].mxu0
    %v1639 = vadd.f32 %v1307, %v1638
    %v1640 = vpop.f32.mrb[0].mxu0
    %v1641 = vadd.f32 %v1311, %v1640
    %1642 = vmatprep.mubr.bf16.mxu0 0
    %1643 = vmatmul.mubr.bf16.gmra.mrb[0].mxu0 %v1391
    %v1644 = vpop.f32.mrb[0].mxu0
    %v1645 = vadd.f32 %v1307, %v1644
    %v1646 = vpop.f32.mrb[0].mxu0
    %v1647 = vadd.f32 %v1311, %v1646
    %v1648 = vpop.f32.mrb[0].mxu0
    %v1649 = vadd.f32 %v1307, %v1648
    %v1650 = vpop.f32.mrb[0].mxu0
    %v1651 = vadd.f32 %v1311, %v1650
    %1652 = vmatprep.mubr.bf16.mxu0 0
    %1653 = vmatmul.mubr.bf16.gmra.mrb[0].mxu0 %v1392
    %v1654 = vpop.f32.mrb[0].mxu0
    %v1655 = vadd.f32 %v1307, %v1654
    %v1656 = vpop.f32.mrb[0].mxu0
    %v1657 = vadd.f32 %v1311, %v1656
    %v1658 = vpop.f32.mrb[0].mxu0
    %v1659 = vadd.f32 %v1307, %v1658
    %v1660 = vpop.f32.mrb[0].mxu0
    %v1661 = vadd.f32 %v1311, %v1660
    %1662 = vmatprep.mubr.bf16.mxu0 0
    %1663 = vmatmul.mubr.bf16.gmra.mrb[0].mxu0 %v1393
    %v1664 = vpop.f32.mrb[0].mxu0
    %v1665 = vadd.f32 %v1307, %v1664
    %v1666 = vpop.f32.mrb[0].mxu0
    %v1667 = vadd.f32 %v1311, %v1666
    %v1668 = vpop.f32.mrb[0].mxu0
    %v1669 = vadd.f32 %v1307, %v1668
    %v1670 = vpop.f32.mrb[0].mxu0
    %v1671 = vadd.f32 %v1311, %v1670
    %1672 = vmatprep.mubr.bf16.mxu0 0
    %1673 = vmatmul.mubr.bf16.gmra.mrb[0].mxu0 %v1394
    %v1674 = vpop.f32.mrb[0].mxu0
    %v1675 = vadd.f32 %v1307, %v1674
    %v1676 = vpop.f32.mrb[0].mxu0
    %v1677 = vadd.f32 %v1311, %v1676
    %v1678 = vpop.f32.mrb[0].mxu0
    %v1679 = vadd.f32 %v1307, %v1678
    %v1680 = vpop.f32.mrb[0].mxu0
    %v1681 = vadd.f32 %v1311, %v1680
    %1682 = vmatprep.mubr.bf16.mxu0 0
    %1683 = vmatmul.mubr.bf16.gmra.mrb[0].mxu0 %v1395
    %v1684 = vpop.f32.mrb[0].mxu0
    %v1685 = vadd.f32 %v1307, %v1684
    %v1686 = vpop.f32.mrb[0].mxu0
    %v1687 = vadd.f32 %v1311, %v1686
    %v1688 = vpop.f32.mrb[0].mxu0
    %v1689 = vadd.f32 %v1307, %v1688
    %v1690 = vpop.f32.mrb[0].mxu0
    %v1691 = vadd.f32 %v1311, %v1690
    %1692 = vmatprep.mubr.bf16.mxu0 0
    %1693 = vmatmul.mubr.bf16.gmra.mrb[0].mxu0 %v1396
    %v1694 = vpop.f32.mrb[0].mxu0
    %v1695 = vadd.f32 %v1307, %v1694
    %v1696 = vpop.f32.mrb[0].mxu0
    %v1697 = vadd.f32 %v1311, %v1696
    %v1698 = vpop.f32.mrb[0].mxu0
    %v1699 = vadd.f32 %v1307, %v1698
    %v1700 = vpop.f32.mrb[0].mxu0
    %v1701 = vadd.f32 %v1311, %v1700
    %1702 = vmatprep.mubr.bf16.mxu0 0
    %1703 = vmatmul.mubr.bf16.gmra.mrb[0].mxu0 %v1397
    %v1704 = vpop.f32.mrb[0].mxu0
    %v1705 = vadd.f32 %v1307, %v1704
    %v1706 = vpop.f32.mrb[0].mxu0
    %v1707 = vadd.f32 %v1311, %v1706
    %v1708 = vpop.f32.mrb[0].mxu0
    %v1709 = vadd.f32 %v1307, %v1708
    %v1710 = vpop.f32.mrb[0].mxu0
    %v1711 = vadd.f32 %v1311, %v1710
    %1712 = vmatprep.mubr.bf16.mxu0 0
    %1713 = vmatmul.mubr.bf16.gmra.mrb[0].mxu0 %v1398
    %v1714 = vpop.f32.mrb[0].mxu0
    %v1715 = vadd.f32 %v1307, %v1714
    %v1716 = vpop.f32.mrb[0].mxu0
    %v1717 = vadd.f32 %v1311, %v1716
    %v1718 = vpop.f32.mrb[0].mxu0
    %v1719 = vadd.f32 %v1307, %v1718
    %v1720 = vpop.f32.mrb[0].mxu0
    %v1721 = vadd.f32 %v1311, %v1720
    %1722 = vmatprep.mubr.bf16.mxu0 0
    %1723 = vmatmul.mubr.bf16.gmra.mrb[0].mxu0 %v1399
    %v1724 = vpop.f32.mrb[0].mxu0
    %v1725 = vadd.f32 %v1307, %v1724
    %v1726 = vpop.f32.mrb[0].mxu0
    %v1727 = vadd.f32 %v1311, %v1726
    %v1728 = vpop.f32.mrb[0].mxu0
    %v1729 = vadd.f32 %v1307, %v1728
    %v1730 = vpop.f32.mrb[0].mxu0
    %v1731 = vadd.f32 %v1311, %v1730
    %1732 = vmatprep.mubr.bf16.mxu0 0
    %1733 = vmatmul.mubr.bf16.gmra.mrb[0].mxu0 %v1400
    %v1734 = vpop.f32.mrb[0].mxu0
    %v1735 = vadd.f32 %v1307, %v1734
    %v1736 = vpop.f32.mrb[0].mxu0
    %v1737 = vadd.f32 %v1311, %v1736
    %v1738 = vpop.f32.mrb[0].mxu0
    %v1739 = vadd.f32 %v1307, %v1738
    %v1740 = vpop.f32.mrb[0].mxu0
    %v1741 = vadd.f32 %v1311, %v1740
    %1742 = vmatprep.mubr.bf16.mxu0 0
    %1743 = vmatmul.mubr.bf16.gmra.mrb[0].mxu0 %v1401
    %v1744 = vpop.f32.mrb[0].mxu0
    %v1745 = vadd.f32 %v1307, %v1744
    %v1746 = vpop.f32.mrb[0].mxu0
    %v1747 = vadd.f32 %v1311, %v1746
    %v1748 = vpop.f32.mrb[0].mxu0
    %v1749 = vadd.f32 %v1307, %v1748
    %v1750 = vpop.f32.mrb[0].mxu0
    %v1751 = vadd.f32 %v1311, %v1750
    %1752 = vmatprep.mubr.bf16.mxu0 0
    %1753 = vmatmul.mubr.bf16.gmra.mrb[0].mxu0 %v1402
    %v1754 = vpop.f32.mrb[0].mxu0
    %v1755 = vadd.f32 %v1307, %v1754
    %v1756 = vpop.f32.mrb[0].mxu0
    %v1757 = vadd.f32 %v1311, %v1756
    %v1758 = vpop.f32.mrb[0].mxu0
    %v1759 = vadd.f32 %v1307, %v1758
    %v1760 = vpop.f32.mrb[0].mxu0
    %v1761 = vadd.f32 %v1311, %v1760
    %1762 = vmatprep.mubr.bf16.mxu0 0
    %1763 = vmatmul.mubr.bf16.gmra.mrb[0].mxu0 %v1403
    %v1764 = vpop.f32.mrb[0].mxu0
    %v1765 = vadd.f32 %v1307, %v1764
    %v1766 = vpop.f32.mrb[0].mxu0
    %v1767 = vadd.f32 %v1311, %v1766
    %v1768 = vpop.f32.mrb[0].mxu0
    %v1769 = vadd.f32 %v1307, %v1768
    %v1770 = vpop.f32.mrb[0].mxu0
    %v1771 = vadd.f32 %v1311, %v1770
    %1772 = vdwg.mxu0
    %1773 = vmatprep.subr.bf16.mxu0 %v1519
    %1774 = vmatpush1.bf16.msra.mxu0 %v1518
    %1775 = vmatprep.subr.bf16.mxu0 %v1523
    %1776 = vmatpush1.bf16.msra.mxu0 %v1522
    %1777 = vmatprep.subr.bf16.mxu0 %v1527
    %1778 = vmatpush1.bf16.msra.mxu0 %v1526
    %1779 = vmatprep.subr.bf16.mxu0 %v1531
    %1780 = vmatpush1.bf16.msra.mxu0 %v1530
    %1781 = vmatprep.subr.bf16.mxu0 %v1535
    %1782 = vmatpush1.bf16.msra.mxu0 %v1534
    %1783 = vmatprep.subr.bf16.mxu0 %v1539
    %1784 = vmatpush1.bf16.msra.mxu0 %v1538
    %1785 = vmatprep.subr.bf16.mxu0 %v1543
    %1786 = vmatpush1.bf16.msra.mxu0 %v1542
    %1787 = vmatprep.subr.bf16.mxu0 %v1547
    %1788 = vmatpush1.bf16.msra.mxu0 %v1546
    %1789 = vmatprep.subr.bf16.mxu0 0
    %1790 = vmatpush1.bf16.msra.mxu0 0
    %1791 = vmatprep.subr.bf16.mxu0 0
    %1792 = vmatpush1.bf16.msra.mxu0 0
    %1793 = vmatprep.subr.bf16.mxu0 0
    %1794 = vmatpush1.bf16.msra.mxu0 0
    %1795 = vmatprep.subr.bf16.mxu0 0
    %1796 = vmatpush1.bf16.msra.mxu0 0
    %1797 = vmatprep.subr.bf16.mxu0 0
    %1798 = vmatpush1.bf16.msra.mxu0 0
    %1799 = vmatprep.subr.bf16.mxu0 0
    %1800 = vmatpush1.bf16.msra.mxu0 0
    %1801 = vmatprep.subr.bf16.mxu0 0
    %1802 = vmatpush1.bf16.msra.mxu0 0
    %1803 = vmatprep.subr.bf16.mxu0 0
    %1804 = vmatpush1.bf16.msra.mxu0 0
    %1805 = vmatprep.mubr.bf16.mxu0 0
    %1806 = vmatmul.mubr.bf16.gmra.mrb[0].mxu0 %v1388
    %v1807 = vpop.f32.mrb[0].mxu0
    %v1808 = vadd.f32 %v1315, %v1807
    %v1809 = vpop.f32.mrb[0].mxu0
    %v1810 = vadd.f32 %v1319, %v1809
    %v1811 = vpop.f32.mrb[0].mxu0
    %v1812 = vadd.f32 %v1315, %v1811
    %v1813 = vpop.f32.mrb[0].mxu0
    %v1814 = vadd.f32 %v1319, %v1813
    %1815 = vmatprep.mubr.bf16.mxu0 0
    %1816 = vmatmul.mubr.bf16.gmra.mrb[0].mxu0 %v1389
    %v1817 = vpop.f32.mrb[0].mxu0
    %v1818 = vadd.f32 %v1315, %v1817
    %v1819 = vpop.f32.mrb[0].mxu0
    %v1820 = vadd.f32 %v1319, %v1819
    %v1821 = vpop.f32.mrb[0].mxu0
    %v1822 = vadd.f32 %v1315, %v1821
    %v1823 = vpop.f32.mrb[0].mxu0
    %v1824 = vadd.f32 %v1319, %v1823
    %1825 = vmatprep.mubr.bf16.mxu0 0
    %1826 = vmatmul.mubr.bf16.gmra.mrb[0].mxu0 %v1390
    %v1827 = vpop.f32.mrb[0].mxu0
    %v1828 = vadd.f32 %v1315, %v1827
    %v1829 = vpop.f32.mrb[0].mxu0
    %v1830 = vadd.f32 %v1319, %v1829
    %v1831 = vpop.f32.mrb[0].mxu0
    %v1832 = vadd.f32 %v1315, %v1831
    %v1833 = vpop.f32.mrb[0].mxu0
    %v1834 = vadd.f32 %v1319, %v1833
    %1835 = vmatprep.mubr.bf16.mxu0 0
    %1836 = vmatmul.mubr.bf16.gmra.mrb[0].mxu0 %v1391
    %v1837 = vpop.f32.mrb[0].mxu0
    %v1838 = vadd.f32 %v1315, %v1837
    %v1839 = vpop.f32.mrb[0].mxu0
    %v1840 = vadd.f32 %v1319, %v1839
    %v1841 = vpop.f32.mrb[0].mxu0
    %v1842 = vadd.f32 %v1315, %v1841
    %v1843 = vpop.f32.mrb[0].mxu0
    %v1844 = vadd.f32 %v1319, %v1843
    %1845 = vmatprep.mubr.bf16.mxu0 0
    %1846 = vmatmul.mubr.bf16.gmra.mrb[0].mxu0 %v1392
    %v1847 = vpop.f32.mrb[0].mxu0
    %v1848 = vadd.f32 %v1315, %v1847
    %v1849 = vpop.f32.mrb[0].mxu0
    %v1850 = vadd.f32 %v1319, %v1849
    %v1851 = vpop.f32.mrb[0].mxu0
    %v1852 = vadd.f32 %v1315, %v1851
    %v1853 = vpop.f32.mrb[0].mxu0
    %v1854 = vadd.f32 %v1319, %v1853
    %1855 = vmatprep.mubr.bf16.mxu0 0
    %1856 = vmatmul.mubr.bf16.gmra.mrb[0].mxu0 %v1393
    %v1857 = vpop.f32.mrb[0].mxu0
    %v1858 = vadd.f32 %v1315, %v1857
    %v1859 = vpop.f32.mrb[0].mxu0
    %v1860 = vadd.f32 %v1319, %v1859
    %v1861 = vpop.f32.mrb[0].mxu0
    %v1862 = vadd.f32 %v1315, %v1861
    %v1863 = vpop.f32.mrb[0].mxu0
    %v1864 = vadd.f32 %v1319, %v1863
    %1865 = vmatprep.mubr.bf16.mxu0 0
    %1866 = vmatmul.mubr.bf16.gmra.mrb[0].mxu0 %v1394
    %v1867 = vpop.f32.mrb[0].mxu0
    %v1868 = vadd.f32 %v1315, %v1867
    %v1869 = vpop.f32.mrb[0].mxu0
    %v1870 = vadd.f32 %v1319, %v1869
    %v1871 = vpop.f32.mrb[0].mxu0
    %v1872 = vadd.f32 %v1315, %v1871
    %v1873 = vpop.f32.mrb[0].mxu0
    %v1874 = vadd.f32 %v1319, %v1873
    %1875 = vmatprep.mubr.bf16.mxu0 0
    %1876 = vmatmul.mubr.bf16.gmra.mrb[0].mxu0 %v1395
    %v1877 = vpop.f32.mrb[0].mxu0
    %v1878 = vadd.f32 %v1315, %v1877
    %v1879 = vpop.f32.mrb[0].mxu0
    %v1880 = vadd.f32 %v1319, %v1879
    %v1881 = vpop.f32.mrb[0].mxu0
    %v1882 = vadd.f32 %v1315, %v1881
    %v1883 = vpop.f32.mrb[0].mxu0
    %v1884 = vadd.f32 %v1319, %v1883
    %1885 = vmatprep.mubr.bf16.mxu0 0
    %1886 = vmatmul.mubr.bf16.gmra.mrb[0].mxu0 %v1396
    %v1887 = vpop.f32.mrb[0].mxu0
    %v1888 = vadd.f32 %v1315, %v1887
    %v1889 = vpop.f32.mrb[0].mxu0
    %v1890 = vadd.f32 %v1319, %v1889
    %v1891 = vpop.f32.mrb[0].mxu0
    %v1892 = vadd.f32 %v1315, %v1891
    %v1893 = vpop.f32.mrb[0].mxu0
    %v1894 = vadd.f32 %v1319, %v1893
    %1895 = vmatprep.mubr.bf16.mxu0 0
    %1896 = vmatmul.mubr.bf16.gmra.mrb[0].mxu0 %v1397
    %v1897 = vpop.f32.mrb[0].mxu0
    %v1898 = vadd.f32 %v1315, %v1897
    %v1899 = vpop.f32.mrb[0].mxu0
    %v1900 = vadd.f32 %v1319, %v1899
    %v1901 = vpop.f32.mrb[0].mxu0
    %v1902 = vadd.f32 %v1315, %v1901
    %v1903 = vpop.f32.mrb[0].mxu0
    %v1904 = vadd.f32 %v1319, %v1903
    %1905 = vmatprep.mubr.bf16.mxu0 0
    %1906 = vmatmul.mubr.bf16.gmra.mrb[0].mxu0 %v1398
    %v1907 = vpop.f32.mrb[0].mxu0
    %v1908 = vadd.f32 %v1315, %v1907
    %v1909 = vpop.f32.mrb[0].mxu0
    %v1910 = vadd.f32 %v1319, %v1909
    %v1911 = vpop.f32.mrb[0].mxu0
    %v1912 = vadd.f32 %v1315, %v1911
    %v1913 = vpop.f32.mrb[0].mxu0
    %v1914 = vadd.f32 %v1319, %v1913
    %1915 = vmatprep.mubr.bf16.mxu0 0
    %1916 = vmatmul.mubr.bf16.gmra.mrb[0].mxu0 %v1399
    %v1917 = vpop.f32.mrb[0].mxu0
    %v1918 = vadd.f32 %v1315, %v1917
    %v1919 = vpop.f32.mrb[0].mxu0
    %v1920 = vadd.f32 %v1319, %v1919
    %v1921 = vpop.f32.mrb[0].mxu0
    %v1922 = vadd.f32 %v1315, %v1921
    %v1923 = vpop.f32.mrb[0].mxu0
    %v1924 = vadd.f32 %v1319, %v1923
    %1925 = vmatprep.mubr.bf16.mxu0 0
    %1926 = vmatmul.mubr.bf16.gmra.mrb[0].mxu0 %v1400
    %v1927 = vpop.f32.mrb[0].mxu0
    %v1928 = vadd.f32 %v1315, %v1927
    %v1929 = vpop.f32.mrb[0].mxu0
    %v1930 = vadd.f32 %v1319, %v1929
    %v1931 = vpop.f32.mrb[0].mxu0
    %v1932 = vadd.f32 %v1315, %v1931
    %v1933 = vpop.f32.mrb[0].mxu0
    %v1934 = vadd.f32 %v1319, %v1933
    %1935 = vmatprep.mubr.bf16.mxu0 0
    %1936 = vmatmul.mubr.bf16.gmra.mrb[0].mxu0 %v1401
    %v1937 = vpop.f32.mrb[0].mxu0
    %v1938 = vadd.f32 %v1315, %v1937
    %v1939 = vpop.f32.mrb[0].mxu0
    %v1940 = vadd.f32 %v1319, %v1939
    %v1941 = vpop.f32.mrb[0].mxu0
    %v1942 = vadd.f32 %v1315, %v1941
    %v1943 = vpop.f32.mrb[0].mxu0
    %v1944 = vadd.f32 %v1319, %v1943
    %1945 = vmatprep.mubr.bf16.mxu0 0
    %1946 = vmatmul.mubr.bf16.gmra.mrb[0].mxu0 %v1402
    %v1947 = vpop.f32.mrb[0].mxu0
    %v1948 = vadd.f32 %v1315, %v1947
    %v1949 = vpop.f32.mrb[0].mxu0
    %v1950 = vadd.f32 %v1319, %v1949
    %v1951 = vpop.f32.mrb[0].mxu0
    %v1952 = vadd.f32 %v1315, %v1951
    %v1953 = vpop.f32.mrb[0].mxu0
    %v1954 = vadd.f32 %v1319, %v1953
    %1955 = vmatprep.mubr.bf16.mxu0 0
    %1956 = vmatmul.mubr.bf16.gmra.mrb[0].mxu0 %v1403
    %v1957 = vpop.f32.mrb[0].mxu0
    %v1958 = vadd.f32 %v1315, %v1957
    %v1959 = vpop.f32.mrb[0].mxu0
    %v1960 = vadd.f32 %v1319, %v1959
    %v1961 = vpop.f32.mrb[0].mxu0
    %v1962 = vadd.f32 %v1315, %v1961
    %v1963 = vpop.f32.mrb[0].mxu0
    %v1964 = vadd.f32 %v1319, %v1963
    %1965 = vdwg.mxu0
    %v1966 = vpack.c.bf16 %v1619, %v1615
    %v1967 = vpack.c.bf16 %v1621, %v1617
    %v1968 = vpack.c.bf16 %v1812, %v1808
    %v1969 = vpack.c.bf16 %v1814, %v1810
    %v1970 = vpack.c.bf16 %v1629, %v1625
    %v1971 = vpack.c.bf16 %v1631, %v1627
    %v1972 = vpack.c.bf16 %v1822, %v1818
    %v1973 = vpack.c.bf16 %v1824, %v1820
    %v1974 = vpack.c.bf16 %v1639, %v1635
    %v1975 = vpack.c.bf16 %v1641, %v1637
    %v1976 = vpack.c.bf16 %v1832, %v1828
    %v1977 = vpack.c.bf16 %v1834, %v1830
    %v1978 = vpack.c.bf16 %v1649, %v1645
    %v1979 = vpack.c.bf16 %v1651, %v1647
    %v1980 = vpack.c.bf16 %v1842, %v1838
    %v1981 = vpack.c.bf16 %v1844, %v1840
    %v1982 = vpack.c.bf16 %v1659, %v1655
    %v1983 = vpack.c.bf16 %v1661, %v1657
    %v1984 = vpack.c.bf16 %v1852, %v1848
    %v1985 = vpack.c.bf16 %v1854, %v1850
    %v1986 = vpack.c.bf16 %v1669, %v1665
    %v1987 = vpack.c.bf16 %v1671, %v1667
    %v1988 = vpack.c.bf16 %v1862, %v1858
    %v1989 = vpack.c.bf16 %v1864, %v1860
    %v1990 = vpack.c.bf16 %v1679, %v1675
    %v1991 = vpack.c.bf16 %v1681, %v1677
    %v1992 = vpack.c.bf16 %v1872, %v1868
    %v1993 = vpack.c.bf16 %v1874, %v1870
    %v1994 = vpack.c.bf16 %v1689, %v1685
    %v1995 = vpack.c.bf16 %v1691, %v1687
    %v1996 = vpack.c.bf16 %v1882, %v1878
    %v1997 = vpack.c.bf16 %v1884, %v1880
    %v1998 = vpack.c.bf16 %v1699, %v1695
    %v1999 = vpack.c.bf16 %v1701, %v1697
    %v2000 = vpack.c.bf16 %v1892, %v1888
    %v2001 = vpack.c.bf16 %v1894, %v1890
    %v2002 = vpack.c.bf16 %v1709, %v1705
    %v2003 = vpack.c.bf16 %v1711, %v1707
    %v2004 = vpack.c.bf16 %v1902, %v1898
    %v2005 = vpack.c.bf16 %v1904, %v1900
    %v2006 = vpack.c.bf16 %v1719, %v1715
    %v2007 = vpack.c.bf16 %v1721, %v1717
    %v2008 = vpack.c.bf16 %v1912, %v1908
    %v2009 = vpack.c.bf16 %v1914, %v1910
    %v2010 = vpack.c.bf16 %v1729, %v1725
    %v2011 = vpack.c.bf16 %v1731, %v1727
    %v2012 = vpack.c.bf16 %v1922, %v1918
    %v2013 = vpack.c.bf16 %v1924, %v1920
    %v2014 = vpack.c.bf16 %v1739, %v1735
    %v2015 = vpack.c.bf16 %v1741, %v1737
    %v2016 = vpack.c.bf16 %v1932, %v1928
    %v2017 = vpack.c.bf16 %v1934, %v1930
    %v2018 = vpack.c.bf16 %v1749, %v1745
    %v2019 = vpack.c.bf16 %v1751, %v1747
    %v2020 = vpack.c.bf16 %v1942, %v1938
    %v2021 = vpack.c.bf16 %v1944, %v1940
    %v2022 = vpack.c.bf16 %v1759, %v1755
    %v2023 = vpack.c.bf16 %v1761, %v1757
    %v2024 = vpack.c.bf16 %v1952, %v1948
    %v2025 = vpack.c.bf16 %v1954, %v1950
    %v2026 = vpack.c.bf16 %v1769, %v1765
    %v2027 = vpack.c.bf16 %v1771, %v1767
    %v2028 = vpack.c.bf16 %v1962, %v1958
    %v2029 = vpack.c.bf16 %v1964, %v1960
    %v2094 = vunpack.c.l.b16 %v1966
    %v2095 = vunpack.c.l.b16 %v1967
    %v2096 = vunpack.c.l.b16 %v1968
    %v2097 = vunpack.c.l.b16 %v1969
    %v2098 = vunpack.c.h.b16 %v1966
    %v2099 = vunpack.c.h.b16 %v1967
    %v2100 = vunpack.c.h.b16 %v1968
    %v2101 = vunpack.c.h.b16 %v1969
    %v2102 = vunpack.c.l.b16 %v1970
    %v2103 = vunpack.c.l.b16 %v1971
    %v2104 = vunpack.c.l.b16 %v1972
    %v2105 = vunpack.c.l.b16 %v1973
    %v2106 = vunpack.c.h.b16 %v1970
    %v2107 = vunpack.c.h.b16 %v1971
    %v2108 = vunpack.c.h.b16 %v1972
    %v2109 = vunpack.c.h.b16 %v1973
    %v2110 = vunpack.c.l.b16 %v1974
    %v2111 = vunpack.c.l.b16 %v1975
    %v2112 = vunpack.c.l.b16 %v1976
    %v2113 = vunpack.c.l.b16 %v1977
    %v2114 = vunpack.c.h.b16 %v1974
    %v2115 = vunpack.c.h.b16 %v1975
    %v2116 = vunpack.c.h.b16 %v1976
    %v2117 = vunpack.c.h.b16 %v1977
    %v2118 = vunpack.c.l.b16 %v1978
    %v2119 = vunpack.c.l.b16 %v1979
    %v2120 = vunpack.c.l.b16 %v1980
    %v2121 = vunpack.c.l.b16 %v1981
    %v2122 = vunpack.c.h.b16 %v1978
    %v2123 = vunpack.c.h.b16 %v1979
    %v2124 = vunpack.c.h.b16 %v1980
    %v2125 = vunpack.c.h.b16 %v1981
    %v2126 = vunpack.c.l.b16 %v1982
    %v2127 = vunpack.c.l.b16 %v1983
    %v2128 = vunpack.c.l.b16 %v1984
    %v2129 = vunpack.c.l.b16 %v1985
    %v2130 = vunpack.c.h.b16 %v1982
    %v2131 = vunpack.c.h.b16 %v1983
    %v2132 = vunpack.c.h.b16 %v1984
    %v2133 = vunpack.c.h.b16 %v1985
    %v2134 = vunpack.c.l.b16 %v1986
    %v2135 = vunpack.c.l.b16 %v1987
    %v2136 = vunpack.c.l.b16 %v1988
    %v2137 = vunpack.c.l.b16 %v1989
    %v2138 = vunpack.c.h.b16 %v1986
    %v2139 = vunpack.c.h.b16 %v1987
    %v2140 = vunpack.c.h.b16 %v1988
    %v2141 = vunpack.c.h.b16 %v1989
    %v2142 = vunpack.c.l.b16 %v1990
    %v2143 = vunpack.c.l.b16 %v1991
    %v2144 = vunpack.c.l.b16 %v1992
    %v2145 = vunpack.c.l.b16 %v1993
    %v2146 = vunpack.c.h.b16 %v1990
    %v2147 = vunpack.c.h.b16 %v1991
    %v2148 = vunpack.c.h.b16 %v1992
    %v2149 = vunpack.c.h.b16 %v1993
    %v2150 = vunpack.c.l.b16 %v1994
    %v2151 = vunpack.c.l.b16 %v1995
    %v2152 = vunpack.c.l.b16 %v1996
    %v2153 = vunpack.c.l.b16 %v1997
    %v2154 = vunpack.c.h.b16 %v1994
    %v2155 = vunpack.c.h.b16 %v1995
    %v2156 = vunpack.c.h.b16 %v1996
    %v2157 = vunpack.c.h.b16 %v1997
    %v2158 = vunpack.c.l.b16 %v1998
    %v2159 = vunpack.c.l.b16 %v1999
    %v2160 = vunpack.c.l.b16 %v2000
    %v2161 = vunpack.c.l.b16 %v2001
    %v2162 = vunpack.c.h.b16 %v1998
    %v2163 = vunpack.c.h.b16 %v1999
    %v2164 = vunpack.c.h.b16 %v2000
    %v2165 = vunpack.c.h.b16 %v2001
    %v2166 = vunpack.c.l.b16 %v2002
    %v2167 = vunpack.c.l.b16 %v2003
    %v2168 = vunpack.c.l.b16 %v2004
    %v2169 = vunpack.c.l.b16 %v2005
    %v2170 = vunpack.c.h.b16 %v2002
    %v2171 = vunpack.c.h.b16 %v2003
    %v2172 = vunpack.c.h.b16 %v2004
    %v2173 = vunpack.c.h.b16 %v2005
    %v2174 = vunpack.c.l.b16 %v2006
    %v2175 = vunpack.c.l.b16 %v2007
    %v2176 = vunpack.c.l.b16 %v2008
    %v2177 = vunpack.c.l.b16 %v2009
    %v2178 = vunpack.c.h.b16 %v2006
    %v2179 = vunpack.c.h.b16 %v2007
    %v2180 = vunpack.c.h.b16 %v2008
    %v2181 = vunpack.c.h.b16 %v2009
    %v2182 = vunpack.c.l.b16 %v2010
    %v2183 = vunpack.c.l.b16 %v2011
    %v2184 = vunpack.c.l.b16 %v2012
    %v2185 = vunpack.c.l.b16 %v2013
    %v2186 = vunpack.c.h.b16 %v2010
    %v2187 = vunpack.c.h.b16 %v2011
    %v2188 = vunpack.c.h.b16 %v2012
    %v2189 = vunpack.c.h.b16 %v2013
    %v2190 = vunpack.c.l.b16 %v2014
    %v2191 = vunpack.c.l.b16 %v2015
    %v2192 = vunpack.c.l.b16 %v2016
    %v2193 = vunpack.c.l.b16 %v2017
    %v2194 = vunpack.c.h.b16 %v2014
    %v2195 = vunpack.c.h.b16 %v2015
    %v2196 = vunpack.c.h.b16 %v2016
    %v2197 = vunpack.c.h.b16 %v2017
    %v2198 = vunpack.c.l.b16 %v2018
    %v2199 = vunpack.c.l.b16 %v2019
    %v2200 = vunpack.c.l.b16 %v2020
    %v2201 = vunpack.c.l.b16 %v2021
    %v2202 = vunpack.c.h.b16 %v2018
    %v2203 = vunpack.c.h.b16 %v2019
    %v2204 = vunpack.c.h.b16 %v2020
    %v2205 = vunpack.c.h.b16 %v2021
    %v2206 = vunpack.c.l.b16 %v2022
    %v2207 = vunpack.c.l.b16 %v2023
    %v2208 = vunpack.c.l.b16 %v2024
    %v2209 = vunpack.c.l.b16 %v2025
    %v2210 = vunpack.c.h.b16 %v2022
    %v2211 = vunpack.c.h.b16 %v2023
    %v2212 = vunpack.c.h.b16 %v2024
    %v2213 = vunpack.c.h.b16 %v2025
    %v2214 = vunpack.c.l.b16 %v2026
    %v2215 = vunpack.c.l.b16 %v2027
    %v2216 = vunpack.c.l.b16 %v2028
    %v2217 = vunpack.c.l.b16 %v2029
    %v2218 = vunpack.c.h.b16 %v2026
    %v2219 = vunpack.c.h.b16 %v2027
    %v2220 = vunpack.c.h.b16 %v2028
    %v2221 = vunpack.c.h.b16 %v2029
    %v2222 = vpack.c.b16 %v2095, %v2094
    %v2223 = vpack.c.b16 %v2097, %v2096
    %v2224 = vpack.c.b16 %v2099, %v2098
    %v2225 = vpack.c.b16 %v2101, %v2100
    %v2226 = vpack.c.b16 %v2103, %v2102
    %v2227 = vpack.c.b16 %v2105, %v2104
    %v2228 = vpack.c.b16 %v2107, %v2106
    %v2229 = vpack.c.b16 %v2109, %v2108
    %v2230 = vpack.c.b16 %v2111, %v2110
    %v2231 = vpack.c.b16 %v2113, %v2112
    %v2232 = vpack.c.b16 %v2115, %v2114
    %v2233 = vpack.c.b16 %v2117, %v2116
    %v2234 = vpack.c.b16 %v2119, %v2118
    %v2235 = vpack.c.b16 %v2121, %v2120
    %v2236 = vpack.c.b16 %v2123, %v2122
    %v2237 = vpack.c.b16 %v2125, %v2124
    %v2238 = vpack.c.b16 %v2127, %v2126
    %v2239 = vpack.c.b16 %v2129, %v2128
    %v2240 = vpack.c.b16 %v2131, %v2130
    %v2241 = vpack.c.b16 %v2133, %v2132
    %v2242 = vpack.c.b16 %v2135, %v2134
    %v2243 = vpack.c.b16 %v2137, %v2136
    %v2244 = vpack.c.b16 %v2139, %v2138
    %v2245 = vpack.c.b16 %v2141, %v2140
    %v2246 = vpack.c.b16 %v2143, %v2142
    %v2247 = vpack.c.b16 %v2145, %v2144
    %v2248 = vpack.c.b16 %v2147, %v2146
    %v2249 = vpack.c.b16 %v2149, %v2148
    %v2250 = vpack.c.b16 %v2151, %v2150
    %v2251 = vpack.c.b16 %v2153, %v2152
    %v2252 = vpack.c.b16 %v2155, %v2154
    %v2253 = vpack.c.b16 %v2157, %v2156
    %v2254 = vpack.c.b16 %v2159, %v2158
    %v2255 = vpack.c.b16 %v2161, %v2160
    %v2256 = vpack.c.b16 %v2163, %v2162
    %v2257 = vpack.c.b16 %v2165, %v2164
    %v2258 = vpack.c.b16 %v2167, %v2166
    %v2259 = vpack.c.b16 %v2169, %v2168
    %v2260 = vpack.c.b16 %v2171, %v2170
    %v2261 = vpack.c.b16 %v2173, %v2172
    %v2262 = vpack.c.b16 %v2175, %v2174
    %v2263 = vpack.c.b16 %v2177, %v2176
    %v2264 = vpack.c.b16 %v2179, %v2178
    %v2265 = vpack.c.b16 %v2181, %v2180
    %v2266 = vpack.c.b16 %v2183, %v2182
    %v2267 = vpack.c.b16 %v2185, %v2184
    %v2268 = vpack.c.b16 %v2187, %v2186
    %v2269 = vpack.c.b16 %v2189, %v2188
    %v2270 = vpack.c.b16 %v2191, %v2190
    %v2271 = vpack.c.b16 %v2193, %v2192
    %v2272 = vpack.c.b16 %v2195, %v2194
    %v2273 = vpack.c.b16 %v2197, %v2196
    %v2274 = vpack.c.b16 %v2199, %v2198
    %v2275 = vpack.c.b16 %v2201, %v2200
    %v2276 = vpack.c.b16 %v2203, %v2202
    %v2277 = vpack.c.b16 %v2205, %v2204
    %v2278 = vpack.c.b16 %v2207, %v2206
    %v2279 = vpack.c.b16 %v2209, %v2208
    %v2280 = vpack.c.b16 %v2211, %v2210
    %v2281 = vpack.c.b16 %v2213, %v2212
    %v2282 = vpack.c.b16 %v2215, %v2214
    %v2283 = vpack.c.b16 %v2217, %v2216
    %v2284 = vpack.c.b16 %v2219, %v2218
    %v2285 = vpack.c.b16 %v2221, %v2220
    %2350 = vst [vmem:[#allocation9] sm:$0xff] %v2222
    %2351 = vst [vmem:[#allocation9 + $0x8] sm:$0xff] %v2223
    %2352 = vst [vmem:[#allocation9 + $0x10] sm:$0xff] %v2224
    %2353 = vst [vmem:[#allocation9 + $0x18] sm:$0xff] %v2225
    %2354 = vst [vmem:[#allocation9 + $0x20] sm:$0xff] %v2226
    %2355 = vst [vmem:[#allocation9 + $0x28] sm:$0xff] %v2227
    %2356 = vst [vmem:[#allocation9 + $0x30] sm:$0xff] %v2228
    %2357 = vst [vmem:[#allocation9 + $0x38] sm:$0xff] %v2229
    %2358 = vst [vmem:[#allocation9 + $0x40] sm:$0xff] %v2230
    %2359 = vst [vmem:[#allocation9 + $0x48] sm:$0xff] %v2231
    %2360 = vst [vmem:[#allocation9 + $0x50] sm:$0xff] %v2232
    %2361 = vst [vmem:[#allocation9 + $0x58] sm:$0xff] %v2233
    %2362 = vst [vmem:[#allocation9 + $0x60] sm:$0xff] %v2234
    %2363 = vst [vmem:[#allocation9 + $0x68] sm:$0xff] %v2235
    %2364 = vst [vmem:[#allocation9 + $0x70] sm:$0xff] %v2236
    %2365 = vst [vmem:[#allocation9 + $0x78] sm:$0xff] %v2237
    %2366 = vst [vmem:[#allocation9 + $0x80] sm:$0xff] %v2238
    %2367 = vst [vmem:[#allocation9 + $0x88] sm:$0xff] %v2239
    %2368 = vst [vmem:[#allocation9 + $0x90] sm:$0xff] %v2240
    %2369 = vst [vmem:[#allocation9 + $0x98] sm:$0xff] %v2241
    %2370 = vst [vmem:[#allocation9 + $0xa0] sm:$0xff] %v2242
    %2371 = vst [vmem:[#allocation9 + $0xa8] sm:$0xff] %v2243
    %2372 = vst [vmem:[#allocation9 + $0xb0] sm:$0xff] %v2244
    %2373 = vst [vmem:[#allocation9 + $0xb8] sm:$0xff] %v2245
    %2374 = vst [vmem:[#allocation9 + $0xc0] sm:$0xff] %v2246
    %2375 = vst [vmem:[#allocation9 + $0xc8] sm:$0xff] %v2247
    %2376 = vst [vmem:[#allocation9 + $0xd0] sm:$0xff] %v2248
    %2377 = vst [vmem:[#allocation9 + $0xd8] sm:$0xff] %v2249
    %2378 = vst [vmem:[#allocation9 + $0xe0] sm:$0xff] %v2250
    %2379 = vst [vmem:[#allocation9 + $0xe8] sm:$0xff] %v2251
    %2380 = vst [vmem:[#allocation9 + $0xf0] sm:$0xff] %v2252
    %2381 = vst [vmem:[#allocation9 + $0xf8] sm:$0xff] %v2253
    %2382 = vst [vmem:[#allocation9 + $0x100] sm:$0xff] %v2254
    %2383 = vst [vmem:[#allocation9 + $0x108] sm:$0xff] %v2255
    %2384 = vst [vmem:[#allocation9 + $0x110] sm:$0xff] %v2256
    %2385 = vst [vmem:[#allocation9 + $0x118] sm:$0xff] %v2257
    %2386 = vst [vmem:[#allocation9 + $0x120] sm:$0xff] %v2258
    %2387 = vst [vmem:[#allocation9 + $0x128] sm:$0xff] %v2259
    %2388 = vst [vmem:[#allocation9 + $0x130] sm:$0xff] %v2260
    %2389 = vst [vmem:[#allocation9 + $0x138] sm:$0xff] %v2261
    %2390 = vst [vmem:[#allocation9 + $0x140] sm:$0xff] %v2262
    %2391 = vst [vmem:[#allocation9 + $0x148] sm:$0xff] %v2263
    %2392 = vst [vmem:[#allocation9 + $0x150] sm:$0xff] %v2264
    %2393 = vst [vmem:[#allocation9 + $0x158] sm:$0xff] %v2265
    %2394 = vst [vmem:[#allocation9 + $0x160] sm:$0xff] %v2266
    %2395 = vst [vmem:[#allocation9 + $0x168] sm:$0xff] %v2267
    %2396 = vst [vmem:[#allocation9 + $0x170] sm:$0xff] %v2268
    %2397 = vst [vmem:[#allocation9 + $0x178] sm:$0xff] %v2269
    %2398 = vst [vmem:[#allocation9 + $0x180] sm:$0xff] %v2270
    %2399 = vst [vmem:[#allocation9 + $0x188] sm:$0xff] %v2271
    %2400 = vst [vmem:[#allocation9 + $0x190] sm:$0xff] %v2272
    %2401 = vst [vmem:[#allocation9 + $0x198] sm:$0xff] %v2273
    %2402 = vst [vmem:[#allocation9 + $0x1a0] sm:$0xff] %v2274
    %2403 = vst [vmem:[#allocation9 + $0x1a8] sm:$0xff] %v2275
    %2404 = vst [vmem:[#allocation9 + $0x1b0] sm:$0xff] %v2276
    %2405 = vst [vmem:[#allocation9 + $0x1b8] sm:$0xff] %v2277
    %2406 = vst [vmem:[#allocation9 + $0x1c0] sm:$0xff] %v2278
    %2407 = vst [vmem:[#allocation9 + $0x1c8] sm:$0xff] %v2279
    %2408 = vst [vmem:[#allocation9 + $0x1d0] sm:$0xff] %v2280
    %2409 = vst [vmem:[#allocation9 + $0x1d8] sm:$0xff] %v2281
    %2410 = vst [vmem:[#allocation9 + $0x1e0] sm:$0xff] %v2282
    %2411 = vst [vmem:[#allocation9 + $0x1e8] sm:$0xff] %v2283
    %2412 = vst [vmem:[#allocation9 + $0x1f0] sm:$0xff] %v2284
    %2413 = vst [vmem:[#allocation9 + $0x1f8] sm:$0xff] %v2285
    // Predicated region
    $region46: #{tpu_custom_call.1} parent=1 // pred_check
      _
    $region47: #{tpu_custom_call.1} parent=1 // pred_check_branch
      %2415 = sbr.rel (0) target = $region49
    $region48: #{tpu_custom_call.1} parent=1 // pred_region
      %s2417 = ssub.s32 2048, 2048
      %2418 = vsyncadd [#allocation5], %s2417
      %s2419 = sshll.u32 [#allocation8], 4
      %s2420 = int_to_ptr.vmem [resolvable:$true] %s2419
      %2425 = dma.vmem_to_hbm [thread:$0]  %s2420, 2048, %s8, [#allocation5], 64, 64, 4
    $region49: #{tpu_custom_call.1} parent=1 // pred_fallthru
      _
    // Predicated region
    $region50: #{tpu_custom_call.1} parent=1 // pred_check
      _
    $region51: #{tpu_custom_call.1} parent=1 // pred_check_branch
      %2427 = sbr.rel (0) target = $region53
    $region52: #{tpu_custom_call.1} parent=1 // pred_region
      %s2429 = ssub.s32 8192, 8192
      %2430 = vsyncadd [#allocation10], %s2429
      %s2431 = sshll.u32 [#allocation9], 4
      %s2432 = int_to_ptr.vmem [resolvable:$true] %s2431
      %2437 = dma.vmem_to_hbm [thread:$0]  %s2432, 8192, %s9, [#allocation10], 256, 256, 16
    $region53: #{tpu_custom_call.1} parent=1 // pred_fallthru
      _
    // Predicated region
    $region54: #{tpu_custom_call.1} parent=1 // pred_check
      _
    $region55: #{tpu_custom_call.1} parent=1 // pred_check_branch
      %2439 = sbr.rel (0) target = $region57
    $region56: #{tpu_custom_call.1} parent=1 // pred_region
      _
    $region57: #{tpu_custom_call.1} parent=1 // pred_fallthru
      _
    // Predicated region
    $region58: #{tpu_custom_call.1} parent=1 // pred_check
      _
    $region59: #{tpu_custom_call.1} parent=1 // pred_check_branch
      %2441 = sbr.rel (0) target = $region61
    $region60: #{tpu_custom_call.1} parent=1 // pred_region
      %2442 = dma.done [#allocation5], 2048
    $region61: #{tpu_custom_call.1} parent=1 // pred_fallthru
      _
    // Predicated region
    $region62: #{tpu_custom_call.1} parent=1 // pred_check
      _
    $region63: #{tpu_custom_call.1} parent=1 // pred_check_branch
      %2444 = sbr.rel (0) target = $region65
    $region64: #{tpu_custom_call.1} parent=1 // pred_region
      %2445 = dma.done [#allocation10], 8192
    $region65: #{tpu_custom_call.1} parent=1 // pred_fallthru
      _
    // Predicated region
    $region66: #{tpu_custom_call.1} parent=1 // pred_check
      _
    $region67: #{tpu_custom_call.1} parent=1 // pred_check_branch
      %2447 = sbr.rel (0) target = $region69
    $region68: #{tpu_custom_call.1} parent=1 // pred_region
      _
    $region69: #{tpu_custom_call.1} parent=1 // pred_fallthru
      _
    %2448 = vsyncpa [#allocation4], 1
    %2449 = vsyncpa [#allocation7], 1
    %2450 = vsyncpa [#allocation5], 1
    %2451 = vsyncpa [#allocation10], 1

</llo_original>
